<compile_context>
chip_gen: v7x
topology: tpu7x:2x2x1
jax: 0.10.0
libtpu: 0.0.40
codegen_flags: <defaults>
</compile_context>

<pallas_src>
import functools
import math

import jax
import jax.numpy as jnp
from jax import lax
from jax.experimental import pallas as pl
from jax.experimental.pallas import tpu as pltpu

NEG_INF = -1e20  # ParlAI's neginf() for float32


def mha_kernel(q_ref, k_ref, v_ref, mask_ref,
               wq_ref, bq_ref, wk_ref, bk_ref, wv_ref, bv_ref,
               wo_ref, bo_ref,
               out_ref, *, n_heads):
    x_q = q_ref[0]                     # (tq, D) f32
    x_k = k_ref[0]                     # (Lk, D) f32
    x_v = v_ref[0]                     # (Lk, D) f32

    # Additive mask bias (0 keep / -1e20 masked), computed once per grid step.
    bias = jnp.where(mask_ref[0] == 0,
                     jnp.float32(NEG_INF), jnp.float32(0.0))       # (1, Lk)

    out_acc = None
    # Static unrolled loop over heads (n_heads is small). Each head's context
    # is folded into the output-projection accumulator immediately, so no
    # concatenate / transpose is needed and per-head live ranges stay bounded.
    for h in range(n_heads):
        # D-wide contraction projections; 1/sqrt(d_h) already folded into wq/bq;
        # weights are pre-arranged host-side (no in-kernel transpose).
        q_h = jnp.dot(x_q, wq_ref[h], preferred_element_type=jnp.float32) + bq_ref[h]
        k_h = jnp.dot(x_k, wk_ref[h], preferred_element_type=jnp.float32) + bk_ref[h]
        v_h = jnp.dot(x_v, wv_ref[h], preferred_element_type=jnp.float32) + bv_ref[h]

        # scores = q_h @ k_h.T without materializing a transpose.
        # bf16 MXU operands, f32 accumulation.
        scores = lax.dot_general(
            q_h.astype(jnp.bfloat16), k_h.astype(jnp.bfloat16),
            dimension_numbers=(((1,), (1,)), ((), ())),
            preferred_element_type=jnp.float32)                    # (tq, Lk)
        scores = scores + bias

        # Softmax with deferred normalization (f32 VPU math).
        m = jnp.max(scores, axis=-1, keepdims=True)
        e = jnp.exp(scores - m)
        s = jnp.sum(e, axis=-1, keepdims=True)
        # TODO(synk): attn_dropout is the identity here (p=0 / eval mode).
        ctx = jnp.dot(e.astype(jnp.bfloat16), v_h.astype(jnp.bfloat16),
                      preferred_element_type=jnp.float32)          # (tq, d_h)
        ctx = ctx * pl.reciprocal(s, approx=True)

        # Fold this head directly into the output projection.
        o_h = jnp.dot(ctx, wo_ref[h], preferred_element_type=jnp.float32)  # (tq, D)
        out_acc = o_h if out_acc is None else out_acc + o_h

    out_ref[0] = (out_acc + bo_ref[0]).astype(out_ref.dtype)


def _pick_block_q(lq, max_tq=512):
    """Largest query tile <= max_tq that divides Lq (multiple of 8 when tiling)."""
    if lq <= max_tq:
        return lq
    start = max_tq - (max_tq % 8)
    for tq in range(start, 7, -8):
        if lq % tq == 0:
            return tq
    return lq


def multi_head_attention(query, key, value, mask, params, *, n_heads):
    """query/key/value: (B, L, D) f32; mask: (B, Lk) int (1=keep, 0=mask)."""
    B, Lq, D = query.shape
    _, Lk, _ = key.shape
    assert D % n_heads == 0
    d_h = D // n_heads
    inv_scale = 1.0 / math.sqrt(d_h)

    wq, bq, wk, bk, wv, bv, wo, bo = params

    # Host-side weight re-arrangement (one-time, outside the kernel):
    #   per-head input-projection slabs (H, D, d_h) == columns of W.T split by
    #   head (so the kernel computes x @ slab with a D-wide contraction), with
    #   the 1/sqrt(d_h) scale folded into the Q projection; output-projection
    #   slabs (H, d_h, D) so each head sums straight into the output.
    def to_heads_in(w):
        return w.T.reshape(D, n_heads, d_h).transpose(1, 0, 2)      # (H, D, d_h)

    wq_h = to_heads_in(wq * inv_scale)
    wk_h = to_heads_in(wk)
    wv_h = to_heads_in(wv)
    bq_h = (bq * inv_scale).reshape(n_heads, 1, d_h)
    bk_h = bk.reshape(n_heads, 1, d_h)
    bv_h = bv.reshape(n_heads, 1, d_h)
    wo_h = wo.T.reshape(n_heads, d_h, D)                            # (H, d_h, D)
    bo2 = bo.reshape(1, D)

    mask3 = mask.reshape(B, 1, Lk).astype(jnp.int32)

    tq = _pick_block_q(Lq)
    n_q_tiles = Lq // tq

    kernel = functools.partial(mha_kernel, n_heads=n_heads)

    q_spec = pl.BlockSpec((1, tq, D), lambda b, qi: (b, qi, 0))
    kv_spec = pl.BlockSpec((1, Lk, D), lambda b, qi: (b, 0, 0))
    mask_spec = pl.BlockSpec((1, 1, Lk), lambda b, qi: (b, 0, 0))
    w_in_spec = pl.BlockSpec((n_heads, D, d_h), lambda b, qi: (0, 0, 0))
    b_in_spec = pl.BlockSpec((n_heads, 1, d_h), lambda b, qi: (0, 0, 0))
    w_out_spec = pl.BlockSpec((n_heads, d_h, D), lambda b, qi: (0, 0, 0))
    b_out_spec = pl.BlockSpec((1, D), lambda b, qi: (0, 0))
    out_spec = pl.BlockSpec((1, tq, D), lambda b, qi: (b, qi, 0))

    return pl.pallas_call(
        kernel,
        out_shape=jax.ShapeDtypeStruct((B, Lq, D), query.dtype),
        grid_spec=pltpu.PrefetchScalarGridSpec(
            num_scalar_prefetch=0,
            grid=(B, n_q_tiles),
            in_specs=[q_spec, kv_spec, kv_spec, mask_spec,
                      w_in_spec, b_in_spec, w_in_spec, b_in_spec,
                      w_in_spec, b_in_spec, w_out_spec, b_out_spec],
            out_specs=out_spec,
        ),
        compiler_params=pltpu.CompilerParams(
            dimension_semantics=("parallel", "parallel"),
            # Explicit VMEM budget so the per-step working set is bounded on
            # v7x's 64 MiB VMEM as well as 128 MiB v5e/v6e.
            vmem_limit_bytes=64 * 1024 * 1024,
        ),
    )(query, key, value, mask3,
      wq_h, bq_h, wk_h, bk_h, wv_h, bv_h, wo_h, bo2)


def reference_mha(query, key, value, mask, params, *, n_heads):
    """Pure-JAX f32 reference mirroring the PyTorch forward."""
    B, Lq, D = query.shape
    _, Lk, _ = key.shape
    d_h = D // n_heads
    wq, bq, wk, bk, wv, bv, wo, bo = params

    def prep(x):
        return (x.reshape(B, -1, n_heads, d_h)
                 .transpose(0, 2, 1, 3)
                 .reshape(B * n_heads, -1, d_h))

    q = prep(query @ wq.T + bq) / math.sqrt(d_h)
    k = prep(key @ wk.T + bk)
    v = prep(value @ wv.T + bv)
    dot = jnp.einsum('bqd,bkd->bqk', q, k)
    attn_mask = jnp.broadcast_to((mask == 0)[:, None, None, :],
                                 (B, n_heads, Lq, Lk)).reshape(B * n_heads, Lq, Lk)
    dot = jnp.where(attn_mask, NEG_INF, dot)
    w = jax.nn.softmax(dot, axis=-1)
    ctx = jnp.einsum('bqk,bkd->bqd', w, v)
    ctx = ctx.reshape(B, n_heads, Lq, d_h).transpose(0, 2, 1, 3).reshape(B, Lq, D)
    return ctx @ wo.T + bo


if __name__ == "__main__":
    B, L, D, H = 2, 8, 32, 4

    key0 = jax.random.PRNGKey(0)
    keys = jax.random.split(key0, 10)

    # xavier_normal_ for weights (gain=1): std = sqrt(2/(fan_in+fan_out))
    std = math.sqrt(2.0 / (D + D))
    bias_bound = 1.0 / math.sqrt(D)  # nn.Linear default bias init

    wq = jax.random.normal(keys[0], (D, D), jnp.float32) * std
    wk = jax.random.normal(keys[1], (D, D), jnp.float32) * std
    wv = jax.random.normal(keys[2], (D, D), jnp.float32) * std
    wo = jax.random.normal(keys[3], (D, D), jnp.float32) * std
    bq = jax.random.uniform(keys[4], (D,), jnp.float32, -bias_bound, bias_bound)
    bk = jax.random.uniform(keys[5], (D,), jnp.float32, -bias_bound, bias_bound)
    bv = jax.random.uniform(keys[6], (D,), jnp.float32, -bias_bound, bias_bound)
    bo = jax.random.uniform(keys[7], (D,), jnp.float32, -bias_bound, bias_bound)
    params = (wq, bq, wk, bk, wv, bv, wo, bo)

    query = jax.random.normal(keys[8], (B, L, D), jnp.float32)
    # self-attention: key = value = query (as in the module when key/value None)
    k_in = query
    v_in = query
    # mask: 1 = attend, 0 = masked (mask out last two key positions of batch 1)
    mask = jnp.ones((B, L), jnp.int32).at[1, -2:].set(0)

    out = multi_head_attention(query, k_in, v_in, mask, params, n_heads=H)
    out = jax.block_until_ready(out)

    ref = reference_mha(query, k_in, v_in, mask, params, n_heads=H)
    assert out.shape == (B, L, D)
    # Tolerance loosened vs. pure-f32 because scores/PV matmuls run with bf16
    # MXU operands (f32 accumulation) and approx reciprocal is used.
    assert jnp.allclose(out, ref, atol=3e-2, rtol=3e-2), \
        f"max abs err {jnp.max(jnp.abs(out - ref))}"

    print("KERNEL_OK")
</pallas_src>

<mosaic_0001>
module attributes {stable_mosaic.version = 11 : i64} {
  func.func @mha_kernel(%arg0: i32, %arg1: i32, %arg2: memref<1x8x32xf32, #tpu.memory_space<vmem>>, %arg3: memref<1x8x32xf32, #tpu.memory_space<vmem>>, %arg4: memref<1x8x32xf32, #tpu.memory_space<vmem>>, %arg5: memref<1x1x8xi32, #tpu.memory_space<vmem>>, %arg6: memref<4x32x8xf32, #tpu.memory_space<vmem>>, %arg7: memref<4x1x8xf32, #tpu.memory_space<vmem>>, %arg8: memref<4x32x8xf32, #tpu.memory_space<vmem>>, %arg9: memref<4x1x8xf32, #tpu.memory_space<vmem>>, %arg10: memref<4x32x8xf32, #tpu.memory_space<vmem>>, %arg11: memref<4x1x8xf32, #tpu.memory_space<vmem>>, %arg12: memref<4x8x32xf32, #tpu.memory_space<vmem>>, %arg13: memref<1x32xf32, #tpu.memory_space<vmem>>, %arg14: memref<1x8x32xf32, #tpu.memory_space<vmem>>) attributes {dimension_semantics = [#tpu.dimension_semantics<parallel>, #tpu.dimension_semantics<parallel>], iteration_bounds = array<i64: 2, 1>, scalar_prefetch = 0 : i64, scratch_operands = 0 : i64, tpu.core_type = #tpu.core_type<tc>, window_params = [{transform_indices = @transform_0, window_bounds = array<i64: 1, 8, 32>}, {transform_indices = @transform_1, window_bounds = array<i64: 1, 8, 32>}, {transform_indices = @transform_2, window_bounds = array<i64: 1, 8, 32>}, {transform_indices = @transform_3, window_bounds = array<i64: 1, 1, 8>}, {pipeline_mode = #tpu.pipeline_mode<synchronous>, transform_indices = @transform_4, window_bounds = array<i64: 4, 32, 8>}, {pipeline_mode = #tpu.pipeline_mode<synchronous>, transform_indices = @transform_5, window_bounds = array<i64: 4, 1, 8>}, {pipeline_mode = #tpu.pipeline_mode<synchronous>, transform_indices = @transform_6, window_bounds = array<i64: 4, 32, 8>}, {pipeline_mode = #tpu.pipeline_mode<synchronous>, transform_indices = @transform_7, window_bounds = array<i64: 4, 1, 8>}, {pipeline_mode = #tpu.pipeline_mode<synchronous>, transform_indices = @transform_8, window_bounds = array<i64: 4, 32, 8>}, {pipeline_mode = #tpu.pipeline_mode<synchronous>, transform_indices = @transform_9, window_bounds = array<i64: 4, 1, 8>}, {pipeline_mode = #tpu.pipeline_mode<synchronous>, transform_indices = @transform_10, window_bounds = array<i64: 4, 8, 32>}, {pipeline_mode = #tpu.pipeline_mode<synchronous>, transform_indices = @transform_11, window_bounds = array<i64: 1, 32>}, {transform_indices = @transform_12, window_bounds = array<i64: 1, 8, 32>}]} {
    %c0 = arith.constant 0 : index
    %c0_0 = arith.constant 0 : index
    %c0_1 = arith.constant 0 : index
    %0 = vector.load %arg2[%c0, %c0_0, %c0_1] : memref<1x8x32xf32, #tpu.memory_space<vmem>>, vector<1x8x32xf32>
    %1 = vector.shape_cast %0 : vector<1x8x32xf32> to vector<8x32xf32>
    %c0_2 = arith.constant 0 : index
    %c0_3 = arith.constant 0 : index
    %c0_4 = arith.constant 0 : index
    %2 = vector.load %arg3[%c0_2, %c0_3, %c0_4] : memref<1x8x32xf32, #tpu.memory_space<vmem>>, vector<1x8x32xf32>
    %3 = vector.shape_cast %2 : vector<1x8x32xf32> to vector<8x32xf32>
    %c0_5 = arith.constant 0 : index
    %c0_6 = arith.constant 0 : index
    %c0_7 = arith.constant 0 : index
    %4 = vector.load %arg4[%c0_5, %c0_6, %c0_7] : memref<1x8x32xf32, #tpu.memory_space<vmem>>, vector<1x8x32xf32>
    %5 = vector.shape_cast %4 : vector<1x8x32xf32> to vector<8x32xf32>
    %c0_8 = arith.constant 0 : index
    %c0_9 = arith.constant 0 : index
    %c0_10 = arith.constant 0 : index
    %6 = vector.load %arg5[%c0_8, %c0_9, %c0_10] : memref<1x1x8xi32, #tpu.memory_space<vmem>>, vector<1x1x8xi32>
    %7 = vector.shape_cast %6 : vector<1x1x8xi32> to vector<1x8xi32>
    %c0_i32 = arith.constant 0 : i32
    %8 = vector.broadcast %c0_i32 : i32 to vector<1x8xi32>
    %9 = arith.cmpi eq, %7, %8 : vector<1x8xi32>
    %cst = arith.constant -1.000000e+20 : f32
    %cst_11 = arith.constant 0.000000e+00 : f32
    %10 = vector.broadcast %cst : f32 to vector<1x8xf32>
    %11 = vector.broadcast %cst_11 : f32 to vector<1x8xf32>
    %12 = arith.select %9, %10, %11 : vector<1x8xi1>, vector<1x8xf32>
    %c0_12 = arith.constant 0 : index
    %c0_13 = arith.constant 0 : index
    %c0_14 = arith.constant 0 : index
    %13 = vector.load %arg6[%c0_12, %c0_13, %c0_14] : memref<4x32x8xf32, #tpu.memory_space<vmem>>, vector<1x32x8xf32>
    %14 = vector.shape_cast %13 : vector<1x32x8xf32> to vector<32x8xf32>
    %cst_15 = arith.constant dense<0.000000e+00> : vector<8x8xf32>
    %15 = tpu.matmul %1, %14, %cst_15 {dimension_numbers = #tpu.dot_dimension_numbers<[1], [0], [0], [1], [0, 0, 1, 1], [], []>} : vector<8x32xf32>, vector<32x8xf32>, vector<8x8xf32> -> vector<8x8xf32>
    %c0_16 = arith.constant 0 : index
    %c0_17 = arith.constant 0 : index
    %c0_18 = arith.constant 0 : index
    %16 = vector.load %arg7[%c0_16, %c0_17, %c0_18] : memref<4x1x8xf32, #tpu.memory_space<vmem>>, vector<1x1x8xf32>
    %17 = vector.shape_cast %16 : vector<1x1x8xf32> to vector<1x8xf32>
    %18 = vector.broadcast %17 : vector<1x8xf32> to vector<8x8xf32>
    %19 = arith.addf %15, %18 : vector<8x8xf32>
    %c0_19 = arith.constant 0 : index
    %c0_20 = arith.constant 0 : index
    %c0_21 = arith.constant 0 : index
    %20 = vector.load %arg8[%c0_19, %c0_20, %c0_21] : memref<4x32x8xf32, #tpu.memory_space<vmem>>, vector<1x32x8xf32>
    %21 = vector.shape_cast %20 : vector<1x32x8xf32> to vector<32x8xf32>
    %cst_22 = arith.constant dense<0.000000e+00> : vector<8x8xf32>
    %22 = tpu.matmul %3, %21, %cst_22 {dimension_numbers = #tpu.dot_dimension_numbers<[1], [0], [0], [1], [0, 0, 1, 1], [], []>} : vector<8x32xf32>, vector<32x8xf32>, vector<8x8xf32> -> vector<8x8xf32>
    %c0_23 = arith.constant 0 : index
    %c0_24 = arith.constant 0 : index
    %c0_25 = arith.constant 0 : index
    %23 = vector.load %arg9[%c0_23, %c0_24, %c0_25] : memref<4x1x8xf32, #tpu.memory_space<vmem>>, vector<1x1x8xf32>
    %24 = vector.shape_cast %23 : vector<1x1x8xf32> to vector<1x8xf32>
    %25 = vector.broadcast %24 : vector<1x8xf32> to vector<8x8xf32>
    %26 = arith.addf %22, %25 : vector<8x8xf32>
    %c0_26 = arith.constant 0 : index
    %c0_27 = arith.constant 0 : index
    %c0_28 = arith.constant 0 : index
    %27 = vector.load %arg10[%c0_26, %c0_27, %c0_28] : memref<4x32x8xf32, #tpu.memory_space<vmem>>, vector<1x32x8xf32>
    %28 = vector.shape_cast %27 : vector<1x32x8xf32> to vector<32x8xf32>
    %cst_29 = arith.constant dense<0.000000e+00> : vector<8x8xf32>
    %29 = tpu.matmul %5, %28, %cst_29 {dimension_numbers = #tpu.dot_dimension_numbers<[1], [0], [0], [1], [0, 0, 1, 1], [], []>} : vector<8x32xf32>, vector<32x8xf32>, vector<8x8xf32> -> vector<8x8xf32>
    %c0_30 = arith.constant 0 : index
    %c0_31 = arith.constant 0 : index
    %c0_32 = arith.constant 0 : index
    %30 = vector.load %arg11[%c0_30, %c0_31, %c0_32] : memref<4x1x8xf32, #tpu.memory_space<vmem>>, vector<1x1x8xf32>
    %31 = vector.shape_cast %30 : vector<1x1x8xf32> to vector<1x8xf32>
    %32 = vector.broadcast %31 : vector<1x8xf32> to vector<8x8xf32>
    %33 = arith.addf %29, %32 : vector<8x8xf32>
    %34 = arith.truncf %19 : vector<8x8xf32> to vector<8x8xbf16>
    %35 = arith.truncf %26 : vector<8x8xf32> to vector<8x8xbf16>
    %cst_33 = arith.constant dense<0.000000e+00> : vector<8x8xf32>
    %36 = tpu.matmul %34, %35, %cst_33 {dimension_numbers = #tpu.dot_dimension_numbers<[1], [1], [0], [0], [0, 0, 1, 0], [], []>} : vector<8x8xbf16>, vector<8x8xbf16>, vector<8x8xf32> -> vector<8x8xf32>
    %37 = vector.broadcast %12 : vector<1x8xf32> to vector<8x8xf32>
    %38 = arith.addf %36, %37 : vector<8x8xf32>
    %cst_34 = arith.constant dense<0xFF800000> : vector<8xf32>
    %39 = vector.multi_reduction <maximumf>, %38, %cst_34 [1] : vector<8x8xf32> to vector<8xf32>
    %40 = vector.shape_cast %39 : vector<8xf32> to vector<8x1xf32>
    %41 = vector.broadcast %40 : vector<8x1xf32> to vector<8x8xf32>
    %42 = arith.subf %38, %41 : vector<8x8xf32>
    %43 = math.exp %42 : vector<8x8xf32>
    %cst_35 = arith.constant dense<0.000000e+00> : vector<8xf32>
    %44 = vector.multi_reduction <add>, %43, %cst_35 [1] : vector<8x8xf32> to vector<8xf32>
    %45 = vector.shape_cast %44 : vector<8xf32> to vector<8x1xf32>
    %46 = arith.truncf %43 : vector<8x8xf32> to vector<8x8xbf16>
    %47 = arith.truncf %33 : vector<8x8xf32> to vector<8x8xbf16>
    %cst_36 = arith.constant dense<0.000000e+00> : vector<8x8xf32>
    %48 = tpu.matmul %46, %47, %cst_36 {dimension_numbers = #tpu.dot_dimension_numbers<[1], [0], [0], [1], [0, 0, 1, 1], [], []>} : vector<8x8xbf16>, vector<8x8xbf16>, vector<8x8xf32> -> vector<8x8xf32>
    %49 = tpu.reciprocal %45 {approx = true} : vector<8x1xf32> -> vector<8x1xf32>
    %50 = vector.broadcast %49 : vector<8x1xf32> to vector<8x8xf32>
    %51 = arith.mulf %48, %50 : vector<8x8xf32>
    %c0_37 = arith.constant 0 : index
    %c0_38 = arith.constant 0 : index
    %c0_39 = arith.constant 0 : index
    %52 = vector.load %arg12[%c0_37, %c0_38, %c0_39] : memref<4x8x32xf32, #tpu.memory_space<vmem>>, vector<1x8x32xf32>
    %53 = vector.shape_cast %52 : vector<1x8x32xf32> to vector<8x32xf32>
    %cst_40 = arith.constant dense<0.000000e+00> : vector<8x32xf32>
    %54 = tpu.matmul %51, %53, %cst_40 {dimension_numbers = #tpu.dot_dimension_numbers<[1], [0], [0], [1], [0, 0, 1, 1], [], []>} : vector<8x8xf32>, vector<8x32xf32>, vector<8x32xf32> -> vector<8x32xf32>
    %c1 = arith.constant 1 : index
    %c0_41 = arith.constant 0 : index
    %c0_42 = arith.constant 0 : index
    %55 = vector.load %arg6[%c1, %c0_41, %c0_42] : memref<4x32x8xf32, #tpu.memory_space<vmem>>, vector<1x32x8xf32>
    %56 = vector.shape_cast %55 : vector<1x32x8xf32> to vector<32x8xf32>
    %cst_43 = arith.constant dense<0.000000e+00> : vector<8x8xf32>
    %57 = tpu.matmul %1, %56, %cst_43 {dimension_numbers = #tpu.dot_dimension_numbers<[1], [0], [0], [1], [0, 0, 1, 1], [], []>} : vector<8x32xf32>, vector<32x8xf32>, vector<8x8xf32> -> vector<8x8xf32>
    %c1_44 = arith.constant 1 : index
    %c0_45 = arith.constant 0 : index
    %c0_46 = arith.constant 0 : index
    %58 = vector.load %arg7[%c1_44, %c0_45, %c0_46] : memref<4x1x8xf32, #tpu.memory_space<vmem>>, vector<1x1x8xf32>
    %59 = vector.shape_cast %58 : vector<1x1x8xf32> to vector<1x8xf32>
    %60 = vector.broadcast %59 : vector<1x8xf32> to vector<8x8xf32>
    %61 = arith.addf %57, %60 : vector<8x8xf32>
    %c1_47 = arith.constant 1 : index
    %c0_48 = arith.constant 0 : index
    %c0_49 = arith.constant 0 : index
    %62 = vector.load %arg8[%c1_47, %c0_48, %c0_49] : memref<4x32x8xf32, #tpu.memory_space<vmem>>, vector<1x32x8xf32>
    %63 = vector.shape_cast %62 : vector<1x32x8xf32> to vector<32x8xf32>
    %cst_50 = arith.constant dense<0.000000e+00> : vector<8x8xf32>
    %64 = tpu.matmul %3, %63, %cst_50 {dimension_numbers = #tpu.dot_dimension_numbers<[1], [0], [0], [1], [0, 0, 1, 1], [], []>} : vector<8x32xf32>, vector<32x8xf32>, vector<8x8xf32> -> vector<8x8xf32>
    %c1_51 = arith.constant 1 : index
    %c0_52 = arith.constant 0 : index
    %c0_53 = arith.constant 0 : index
    %65 = vector.load %arg9[%c1_51, %c0_52, %c0_53] : memref<4x1x8xf32, #tpu.memory_space<vmem>>, vector<1x1x8xf32>
    %66 = vector.shape_cast %65 : vector<1x1x8xf32> to vector<1x8xf32>
    %67 = vector.broadcast %66 : vector<1x8xf32> to vector<8x8xf32>
    %68 = arith.addf %64, %67 : vector<8x8xf32>
    %c1_54 = arith.constant 1 : index
    %c0_55 = arith.constant 0 : index
    %c0_56 = arith.constant 0 : index
    %69 = vector.load %arg10[%c1_54, %c0_55, %c0_56] : memref<4x32x8xf32, #tpu.memory_space<vmem>>, vector<1x32x8xf32>
    %70 = vector.shape_cast %69 : vector<1x32x8xf32> to vector<32x8xf32>
    %cst_57 = arith.constant dense<0.000000e+00> : vector<8x8xf32>
    %71 = tpu.matmul %5, %70, %cst_57 {dimension_numbers = #tpu.dot_dimension_numbers<[1], [0], [0], [1], [0, 0, 1, 1], [], []>} : vector<8x32xf32>, vector<32x8xf32>, vector<8x8xf32> -> vector<8x8xf32>
    %c1_58 = arith.constant 1 : index
    %c0_59 = arith.constant 0 : index
    %c0_60 = arith.constant 0 : index
    %72 = vector.load %arg11[%c1_58, %c0_59, %c0_60] : memref<4x1x8xf32, #tpu.memory_space<vmem>>, vector<1x1x8xf32>
    %73 = vector.shape_cast %72 : vector<1x1x8xf32> to vector<1x8xf32>
    %74 = vector.broadcast %73 : vector<1x8xf32> to vector<8x8xf32>
    %75 = arith.addf %71, %74 : vector<8x8xf32>
    %76 = arith.truncf %61 : vector<8x8xf32> to vector<8x8xbf16>
    %77 = arith.truncf %68 : vector<8x8xf32> to vector<8x8xbf16>
    %cst_61 = arith.constant dense<0.000000e+00> : vector<8x8xf32>
    %78 = tpu.matmul %76, %77, %cst_61 {dimension_numbers = #tpu.dot_dimension_numbers<[1], [1], [0], [0], [0, 0, 1, 0], [], []>} : vector<8x8xbf16>, vector<8x8xbf16>, vector<8x8xf32> -> vector<8x8xf32>
    %79 = vector.broadcast %12 : vector<1x8xf32> to vector<8x8xf32>
    %80 = arith.addf %78, %79 : vector<8x8xf32>
    %cst_62 = arith.constant dense<0xFF800000> : vector<8xf32>
    %81 = vector.multi_reduction <maximumf>, %80, %cst_62 [1] : vector<8x8xf32> to vector<8xf32>
    %82 = vector.shape_cast %81 : vector<8xf32> to vector<8x1xf32>
    %83 = vector.broadcast %82 : vector<8x1xf32> to vector<8x8xf32>
    %84 = arith.subf %80, %83 : vector<8x8xf32>
    %85 = math.exp %84 : vector<8x8xf32>
    %cst_63 = arith.constant dense<0.000000e+00> : vector<8xf32>
    %86 = vector.multi_reduction <add>, %85, %cst_63 [1] : vector<8x8xf32> to vector<8xf32>
    %87 = vector.shape_cast %86 : vector<8xf32> to vector<8x1xf32>
    %88 = arith.truncf %85 : vector<8x8xf32> to vector<8x8xbf16>
    %89 = arith.truncf %75 : vector<8x8xf32> to vector<8x8xbf16>
    %cst_64 = arith.constant dense<0.000000e+00> : vector<8x8xf32>
    %90 = tpu.matmul %88, %89, %cst_64 {dimension_numbers = #tpu.dot_dimension_numbers<[1], [0], [0], [1], [0, 0, 1, 1], [], []>} : vector<8x8xbf16>, vector<8x8xbf16>, vector<8x8xf32> -> vector<8x8xf32>
    %91 = tpu.reciprocal %87 {approx = true} : vector<8x1xf32> -> vector<8x1xf32>
    %92 = vector.broadcast %91 : vector<8x1xf32> to vector<8x8xf32>
    %93 = arith.mulf %90, %92 : vector<8x8xf32>
    %c1_65 = arith.constant 1 : index
    %c0_66 = arith.constant 0 : index
    %c0_67 = arith.constant 0 : index
    %94 = vector.load %arg12[%c1_65, %c0_66, %c0_67] : memref<4x8x32xf32, #tpu.memory_space<vmem>>, vector<1x8x32xf32>
    %95 = vector.shape_cast %94 : vector<1x8x32xf32> to vector<8x32xf32>
    %cst_68 = arith.constant dense<0.000000e+00> : vector<8x32xf32>
    %96 = tpu.matmul %93, %95, %cst_68 {dimension_numbers = #tpu.dot_dimension_numbers<[1], [0], [0], [1], [0, 0, 1, 1], [], []>} : vector<8x8xf32>, vector<8x32xf32>, vector<8x32xf32> -> vector<8x32xf32>
    %97 = arith.addf %54, %96 : vector<8x32xf32>
    %c2 = arith.constant 2 : index
    %c0_69 = arith.constant 0 : index
    %c0_70 = arith.constant 0 : index
    %98 = vector.load %arg6[%c2, %c0_69, %c0_70] : memref<4x32x8xf32, #tpu.memory_space<vmem>>, vector<1x32x8xf32>
    %99 = vector.shape_cast %98 : vector<1x32x8xf32> to vector<32x8xf32>
    %cst_71 = arith.constant dense<0.000000e+00> : vector<8x8xf32>
    %100 = tpu.matmul %1, %99, %cst_71 {dimension_numbers = #tpu.dot_dimension_numbers<[1], [0], [0], [1], [0, 0, 1, 1], [], []>} : vector<8x32xf32>, vector<32x8xf32>, vector<8x8xf32> -> vector<8x8xf32>
    %c2_72 = arith.constant 2 : index
    %c0_73 = arith.constant 0 : index
    %c0_74 = arith.constant 0 : index
    %101 = vector.load %arg7[%c2_72, %c0_73, %c0_74] : memref<4x1x8xf32, #tpu.memory_space<vmem>>, vector<1x1x8xf32>
    %102 = vector.shape_cast %101 : vector<1x1x8xf32> to vector<1x8xf32>
    %103 = vector.broadcast %102 : vector<1x8xf32> to vector<8x8xf32>
    %104 = arith.addf %100, %103 : vector<8x8xf32>
    %c2_75 = arith.constant 2 : index
    %c0_76 = arith.constant 0 : index
    %c0_77 = arith.constant 0 : index
    %105 = vector.load %arg8[%c2_75, %c0_76, %c0_77] : memref<4x32x8xf32, #tpu.memory_space<vmem>>, vector<1x32x8xf32>
    %106 = vector.shape_cast %105 : vector<1x32x8xf32> to vector<32x8xf32>
    %cst_78 = arith.constant dense<0.000000e+00> : vector<8x8xf32>
    %107 = tpu.matmul %3, %106, %cst_78 {dimension_numbers = #tpu.dot_dimension_numbers<[1], [0], [0], [1], [0, 0, 1, 1], [], []>} : vector<8x32xf32>, vector<32x8xf32>, vector<8x8xf32> -> vector<8x8xf32>
    %c2_79 = arith.constant 2 : index
    %c0_80 = arith.constant 0 : index
    %c0_81 = arith.constant 0 : index
    %108 = vector.load %arg9[%c2_79, %c0_80, %c0_81] : memref<4x1x8xf32, #tpu.memory_space<vmem>>, vector<1x1x8xf32>
    %109 = vector.shape_cast %108 : vector<1x1x8xf32> to vector<1x8xf32>
    %110 = vector.broadcast %109 : vector<1x8xf32> to vector<8x8xf32>
    %111 = arith.addf %107, %110 : vector<8x8xf32>
    %c2_82 = arith.constant 2 : index
    %c0_83 = arith.constant 0 : index
    %c0_84 = arith.constant 0 : index
    %112 = vector.load %arg10[%c2_82, %c0_83, %c0_84] : memref<4x32x8xf32, #tpu.memory_space<vmem>>, vector<1x32x8xf32>
    %113 = vector.shape_cast %112 : vector<1x32x8xf32> to vector<32x8xf32>
    %cst_85 = arith.constant dense<0.000000e+00> : vector<8x8xf32>
    %114 = tpu.matmul %5, %113, %cst_85 {dimension_numbers = #tpu.dot_dimension_numbers<[1], [0], [0], [1], [0, 0, 1, 1], [], []>} : vector<8x32xf32>, vector<32x8xf32>, vector<8x8xf32> -> vector<8x8xf32>
    %c2_86 = arith.constant 2 : index
    %c0_87 = arith.constant 0 : index
    %c0_88 = arith.constant 0 : index
    %115 = vector.load %arg11[%c2_86, %c0_87, %c0_88] : memref<4x1x8xf32, #tpu.memory_space<vmem>>, vector<1x1x8xf32>
    %116 = vector.shape_cast %115 : vector<1x1x8xf32> to vector<1x8xf32>
    %117 = vector.broadcast %116 : vector<1x8xf32> to vector<8x8xf32>
    %118 = arith.addf %114, %117 : vector<8x8xf32>
    %119 = arith.truncf %104 : vector<8x8xf32> to vector<8x8xbf16>
    %120 = arith.truncf %111 : vector<8x8xf32> to vector<8x8xbf16>
    %cst_89 = arith.constant dense<0.000000e+00> : vector<8x8xf32>
    %121 = tpu.matmul %119, %120, %cst_89 {dimension_numbers = #tpu.dot_dimension_numbers<[1], [1], [0], [0], [0, 0, 1, 0], [], []>} : vector<8x8xbf16>, vector<8x8xbf16>, vector<8x8xf32> -> vector<8x8xf32>
    %122 = vector.broadcast %12 : vector<1x8xf32> to vector<8x8xf32>
    %123 = arith.addf %121, %122 : vector<8x8xf32>
    %cst_90 = arith.constant dense<0xFF800000> : vector<8xf32>
    %124 = vector.multi_reduction <maximumf>, %123, %cst_90 [1] : vector<8x8xf32> to vector<8xf32>
    %125 = vector.shape_cast %124 : vector<8xf32> to vector<8x1xf32>
    %126 = vector.broadcast %125 : vector<8x1xf32> to vector<8x8xf32>
    %127 = arith.subf %123, %126 : vector<8x8xf32>
    %128 = math.exp %127 : vector<8x8xf32>
    %cst_91 = arith.constant dense<0.000000e+00> : vector<8xf32>
    %129 = vector.multi_reduction <add>, %128, %cst_91 [1] : vector<8x8xf32> to vector<8xf32>
    %130 = vector.shape_cast %129 : vector<8xf32> to vector<8x1xf32>
    %131 = arith.truncf %128 : vector<8x8xf32> to vector<8x8xbf16>
    %132 = arith.truncf %118 : vector<8x8xf32> to vector<8x8xbf16>
    %cst_92 = arith.constant dense<0.000000e+00> : vector<8x8xf32>
    %133 = tpu.matmul %131, %132, %cst_92 {dimension_numbers = #tpu.dot_dimension_numbers<[1], [0], [0], [1], [0, 0, 1, 1], [], []>} : vector<8x8xbf16>, vector<8x8xbf16>, vector<8x8xf32> -> vector<8x8xf32>
    %134 = tpu.reciprocal %130 {approx = true} : vector<8x1xf32> -> vector<8x1xf32>
    %135 = vector.broadcast %134 : vector<8x1xf32> to vector<8x8xf32>
    %136 = arith.mulf %133, %135 : vector<8x8xf32>
    %c2_93 = arith.constant 2 : index
    %c0_94 = arith.constant 0 : index
    %c0_95 = arith.constant 0 : index
    %137 = vector.load %arg12[%c2_93, %c0_94, %c0_95] : memref<4x8x32xf32, #tpu.memory_space<vmem>>, vector<1x8x32xf32>
    %138 = vector.shape_cast %137 : vector<1x8x32xf32> to vector<8x32xf32>
    %cst_96 = arith.constant dense<0.000000e+00> : vector<8x32xf32>
    %139 = tpu.matmul %136, %138, %cst_96 {dimension_numbers = #tpu.dot_dimension_numbers<[1], [0], [0], [1], [0, 0, 1, 1], [], []>} : vector<8x8xf32>, vector<8x32xf32>, vector<8x32xf32> -> vector<8x32xf32>
    %140 = arith.addf %97, %139 : vector<8x32xf32>
    %c3 = arith.constant 3 : index
    %c0_97 = arith.constant 0 : index
    %c0_98 = arith.constant 0 : index
    %141 = vector.load %arg6[%c3, %c0_97, %c0_98] : memref<4x32x8xf32, #tpu.memory_space<vmem>>, vector<1x32x8xf32>
    %142 = vector.shape_cast %141 : vector<1x32x8xf32> to vector<32x8xf32>
    %cst_99 = arith.constant dense<0.000000e+00> : vector<8x8xf32>
    %143 = tpu.matmul %1, %142, %cst_99 {dimension_numbers = #tpu.dot_dimension_numbers<[1], [0], [0], [1], [0, 0, 1, 1], [], []>} : vector<8x32xf32>, vector<32x8xf32>, vector<8x8xf32> -> vector<8x8xf32>
    %c3_100 = arith.constant 3 : index
    %c0_101 = arith.constant 0 : index
    %c0_102 = arith.constant 0 : index
    %144 = vector.load %arg7[%c3_100, %c0_101, %c0_102] : memref<4x1x8xf32, #tpu.memory_space<vmem>>, vector<1x1x8xf32>
    %145 = vector.shape_cast %144 : vector<1x1x8xf32> to vector<1x8xf32>
    %146 = vector.broadcast %145 : vector<1x8xf32> to vector<8x8xf32>
    %147 = arith.addf %143, %146 : vector<8x8xf32>
    %c3_103 = arith.constant 3 : index
    %c0_104 = arith.constant 0 : index
    %c0_105 = arith.constant 0 : index
    %148 = vector.load %arg8[%c3_103, %c0_104, %c0_105] : memref<4x32x8xf32, #tpu.memory_space<vmem>>, vector<1x32x8xf32>
    %149 = vector.shape_cast %148 : vector<1x32x8xf32> to vector<32x8xf32>
    %cst_106 = arith.constant dense<0.000000e+00> : vector<8x8xf32>
    %150 = tpu.matmul %3, %149, %cst_106 {dimension_numbers = #tpu.dot_dimension_numbers<[1], [0], [0], [1], [0, 0, 1, 1], [], []>} : vector<8x32xf32>, vector<32x8xf32>, vector<8x8xf32> -> vector<8x8xf32>
    %c3_107 = arith.constant 3 : index
    %c0_108 = arith.constant 0 : index
    %c0_109 = arith.constant 0 : index
    %151 = vector.load %arg9[%c3_107, %c0_108, %c0_109] : memref<4x1x8xf32, #tpu.memory_space<vmem>>, vector<1x1x8xf32>
    %152 = vector.shape_cast %151 : vector<1x1x8xf32> to vector<1x8xf32>
    %153 = vector.broadcast %152 : vector<1x8xf32> to vector<8x8xf32>
    %154 = arith.addf %150, %153 : vector<8x8xf32>
    %c3_110 = arith.constant 3 : index
    %c0_111 = arith.constant 0 : index
    %c0_112 = arith.constant 0 : index
    %155 = vector.load %arg10[%c3_110, %c0_111, %c0_112] : memref<4x32x8xf32, #tpu.memory_space<vmem>>, vector<1x32x8xf32>
    %156 = vector.shape_cast %155 : vector<1x32x8xf32> to vector<32x8xf32>
    %cst_113 = arith.constant dense<0.000000e+00> : vector<8x8xf32>
    %157 = tpu.matmul %5, %156, %cst_113 {dimension_numbers = #tpu.dot_dimension_numbers<[1], [0], [0], [1], [0, 0, 1, 1], [], []>} : vector<8x32xf32>, vector<32x8xf32>, vector<8x8xf32> -> vector<8x8xf32>
    %c3_114 = arith.constant 3 : index
    %c0_115 = arith.constant 0 : index
    %c0_116 = arith.constant 0 : index
    %158 = vector.load %arg11[%c3_114, %c0_115, %c0_116] : memref<4x1x8xf32, #tpu.memory_space<vmem>>, vector<1x1x8xf32>
    %159 = vector.shape_cast %158 : vector<1x1x8xf32> to vector<1x8xf32>
    %160 = vector.broadcast %159 : vector<1x8xf32> to vector<8x8xf32>
    %161 = arith.addf %157, %160 : vector<8x8xf32>
    %162 = arith.truncf %147 : vector<8x8xf32> to vector<8x8xbf16>
    %163 = arith.truncf %154 : vector<8x8xf32> to vector<8x8xbf16>
    %cst_117 = arith.constant dense<0.000000e+00> : vector<8x8xf32>
    %164 = tpu.matmul %162, %163, %cst_117 {dimension_numbers = #tpu.dot_dimension_numbers<[1], [1], [0], [0], [0, 0, 1, 0], [], []>} : vector<8x8xbf16>, vector<8x8xbf16>, vector<8x8xf32> -> vector<8x8xf32>
    %165 = vector.broadcast %12 : vector<1x8xf32> to vector<8x8xf32>
    %166 = arith.addf %164, %165 : vector<8x8xf32>
    %cst_118 = arith.constant dense<0xFF800000> : vector<8xf32>
    %167 = vector.multi_reduction <maximumf>, %166, %cst_118 [1] : vector<8x8xf32> to vector<8xf32>
    %168 = vector.shape_cast %167 : vector<8xf32> to vector<8x1xf32>
    %169 = vector.broadcast %168 : vector<8x1xf32> to vector<8x8xf32>
    %170 = arith.subf %166, %169 : vector<8x8xf32>
    %171 = math.exp %170 : vector<8x8xf32>
    %cst_119 = arith.constant dense<0.000000e+00> : vector<8xf32>
    %172 = vector.multi_reduction <add>, %171, %cst_119 [1] : vector<8x8xf32> to vector<8xf32>
    %173 = vector.shape_cast %172 : vector<8xf32> to vector<8x1xf32>
    %174 = arith.truncf %171 : vector<8x8xf32> to vector<8x8xbf16>
    %175 = arith.truncf %161 : vector<8x8xf32> to vector<8x8xbf16>
    %cst_120 = arith.constant dense<0.000000e+00> : vector<8x8xf32>
    %176 = tpu.matmul %174, %175, %cst_120 {dimension_numbers = #tpu.dot_dimension_numbers<[1], [0], [0], [1], [0, 0, 1, 1], [], []>} : vector<8x8xbf16>, vector<8x8xbf16>, vector<8x8xf32> -> vector<8x8xf32>
    %177 = tpu.reciprocal %173 {approx = true} : vector<8x1xf32> -> vector<8x1xf32>
    %178 = vector.broadcast %177 : vector<8x1xf32> to vector<8x8xf32>
    %179 = arith.mulf %176, %178 : vector<8x8xf32>
    %c3_121 = arith.constant 3 : index
    %c0_122 = arith.constant 0 : index
    %c0_123 = arith.constant 0 : index
    %180 = vector.load %arg12[%c3_121, %c0_122, %c0_123] : memref<4x8x32xf32, #tpu.memory_space<vmem>>, vector<1x8x32xf32>
    %181 = vector.shape_cast %180 : vector<1x8x32xf32> to vector<8x32xf32>
    %cst_124 = arith.constant dense<0.000000e+00> : vector<8x32xf32>
    %182 = tpu.matmul %179, %181, %cst_124 {dimension_numbers = #tpu.dot_dimension_numbers<[1], [0], [0], [1], [0, 0, 1, 1], [], []>} : vector<8x8xf32>, vector<8x32xf32>, vector<8x32xf32> -> vector<8x32xf32>
    %183 = arith.addf %140, %182 : vector<8x32xf32>
    %c0_125 = arith.constant 0 : index
    %c0_126 = arith.constant 0 : index
    %184 = vector.load %arg13[%c0_125, %c0_126] : memref<1x32xf32, #tpu.memory_space<vmem>>, vector<1x32xf32>
    %185 = vector.shape_cast %184 : vector<1x32xf32> to vector<32xf32>
    %186 = vector.shape_cast %185 : vector<32xf32> to vector<1x32xf32>
    %187 = vector.broadcast %186 : vector<1x32xf32> to vector<8x32xf32>
    %188 = arith.addf %183, %187 : vector<8x32xf32>
    %c0_127 = arith.constant 0 : index
    %c0_128 = arith.constant 0 : index
    %c0_129 = arith.constant 0 : index
    %189 = vector.load %arg14[%c0_127, %c0_128, %c0_129] : memref<1x8x32xf32, #tpu.memory_space<vmem>>, vector<1x8x32xf32>
    %190 = vector.shape_cast %189 : vector<1x8x32xf32> to vector<8x32xf32>
    %191 = vector.shape_cast %188 : vector<8x32xf32> to vector<1x8x32xf32>
    tpu.vector_store %arg14[%c0_127, %c0_128, %c0_129], %191 {strides = array<i32>} : memref<1x8x32xf32, #tpu.memory_space<vmem>>, vector<1x8x32xf32>,
    return
  }
  func.func @transform_0(%arg0: i32, %arg1: i32) -> (i32, i32, i32) {
    %c0_i32 = arith.constant 0 : i32
    %c0_i32_0 = arith.constant 0 : i32
    return %arg0, %arg1, %c0_i32 : i32, i32, i32
  }
  func.func @transform_1(%arg0: i32, %arg1: i32) -> (i32, i32, i32) {
    %c0_i32 = arith.constant 0 : i32
    %c0_i32_0 = arith.constant 0 : i32
    %c0_i32_1 = arith.constant 0 : i32
    return %arg0, %c0_i32, %c0_i32_0 : i32, i32, i32
  }
  func.func @transform_2(%arg0: i32, %arg1: i32) -> (i32, i32, i32) {
    %c0_i32 = arith.constant 0 : i32
    %c0_i32_0 = arith.constant 0 : i32
    %c0_i32_1 = arith.constant 0 : i32
    return %arg0, %c0_i32, %c0_i32_0 : i32, i32, i32
  }
  func.func @transform_3(%arg0: i32, %arg1: i32) -> (i32, i32, i32) {
    %c0_i32 = arith.constant 0 : i32
    %c0_i32_0 = arith.constant 0 : i32
    %c0_i32_1 = arith.constant 0 : i32
    return %arg0, %c0_i32, %c0_i32_0 : i32, i32, i32
  }
  func.func @transform_4(%arg0: i32, %arg1: i32) -> (i32, i32, i32) {
    %c0_i32 = arith.constant 0 : i32
    %c0_i32_0 = arith.constant 0 : i32
    %c0_i32_1 = arith.constant 0 : i32
    %c0_i32_2 = arith.constant 0 : i32
    return %c0_i32, %c0_i32_0, %c0_i32_1 : i32, i32, i32
  }
  func.func @transform_5(%arg0: i32, %arg1: i32) -> (i32, i32, i32) {
    %c0_i32 = arith.constant 0 : i32
    %c0_i32_0 = arith.constant 0 : i32
    %c0_i32_1 = arith.constant 0 : i32
    %c0_i32_2 = arith.constant 0 : i32
    return %c0_i32, %c0_i32_0, %c0_i32_1 : i32, i32, i32
  }
  func.func @transform_6(%arg0: i32, %arg1: i32) -> (i32, i32, i32) {
    %c0_i32 = arith.constant 0 : i32
    %c0_i32_0 = arith.constant 0 : i32
    %c0_i32_1 = arith.constant 0 : i32
    %c0_i32_2 = arith.constant 0 : i32
    return %c0_i32, %c0_i32_0, %c0_i32_1 : i32, i32, i32
  }
  func.func @transform_7(%arg0: i32, %arg1: i32) -> (i32, i32, i32) {
    %c0_i32 = arith.constant 0 : i32
    %c0_i32_0 = arith.constant 0 : i32
    %c0_i32_1 = arith.constant 0 : i32
    %c0_i32_2 = arith.constant 0 : i32
    return %c0_i32, %c0_i32_0, %c0_i32_1 : i32, i32, i32
  }
  func.func @transform_8(%arg0: i32, %arg1: i32) -> (i32, i32, i32) {
    %c0_i32 = arith.constant 0 : i32
    %c0_i32_0 = arith.constant 0 : i32
    %c0_i32_1 = arith.constant 0 : i32
    %c0_i32_2 = arith.constant 0 : i32
    return %c0_i32, %c0_i32_0, %c0_i32_1 : i32, i32, i32
  }
  func.func @transform_9(%arg0: i32, %arg1: i32) -> (i32, i32, i32) {
    %c0_i32 = arith.constant 0 : i32
    %c0_i32_0 = arith.constant 0 : i32
    %c0_i32_1 = arith.constant 0 : i32
    %c0_i32_2 = arith.constant 0 : i32
    return %c0_i32, %c0_i32_0, %c0_i32_1 : i32, i32, i32
  }
  func.func @transform_10(%arg0: i32, %arg1: i32) -> (i32, i32, i32) {
    %c0_i32 = arith.constant 0 : i32
    %c0_i32_0 = arith.constant 0 : i32
    %c0_i32_1 = arith.constant 0 : i32
    %c0_i32_2 = arith.constant 0 : i32
    return %c0_i32, %c0_i32_0, %c0_i32_1 : i32, i32, i32
  }
  func.func @transform_11(%arg0: i32, %arg1: i32) -> (i32, i32) {
    %c0_i32 = arith.constant 0 : i32
    %c0_i32_0 = arith.constant 0 : i32
    %c0_i32_1 = arith.constant 0 : i32
    return %c0_i32, %c0_i32_0 : i32, i32
  }
  func.func @transform_12(%arg0: i32, %arg1: i32) -> (i32, i32, i32) {
    %c0_i32 = arith.constant 0 : i32
    %c0_i32_0 = arith.constant 0 : i32
    return %arg0, %arg1, %c0_i32 : i32, i32, i32
  }
}

</mosaic_0001>

<llo_original>
// kernel: tpu_custom_call.1
$region0: #{tpu_custom_call.1}
  #allocation0 [shape = 'u32[]', space=smem, size = 0x4, offset = 0x4, fixed_abs, tag = 'smem constant byte address 0x4 - core index']
  #allocation1 [shape = 'u32[144,128]{1,0:T(1,128)}', space=vmem, size = 0x12000, scoped, tag = 'internal scratch']
  %s0 = inlined_call_operand.hbm [shape: f32[2,8,32], index: 0, kind: input, shape index: {}]
  %s1 = inlined_call_operand.hbm [shape: f32[2,8,32], index: 1, kind: input, shape index: {}]
  %s2 = inlined_call_operand.hbm [shape: f32[2,8,32], index: 2, kind: input, shape index: {}]
  %s3 = inlined_call_operand.hbm [shape: s32[2,1,8], index: 3, kind: input, shape index: {}]
  %s4 = inlined_call_operand.hbm [shape: f32[4,32,8], index: 4, kind: input, shape index: {}]
  %s5 = inlined_call_operand.hbm [shape: f32[4,1,8], index: 5, kind: input, shape index: {}]
  %s6 = inlined_call_operand.hbm [shape: f32[4,32,8], index: 6, kind: input, shape index: {}]
  %s7 = inlined_call_operand.hbm [shape: f32[4,1,8], index: 7, kind: input, shape index: {}]
  %s8 = inlined_call_operand.hbm [shape: f32[4,32,8], index: 8, kind: input, shape index: {}]
  %s9 = inlined_call_operand.hbm [shape: f32[4,1,8], index: 9, kind: input, shape index: {}]
  %s10 = inlined_call_operand.hbm [shape: f32[4,8,32], index: 10, kind: input, shape index: {}]
  %s11 = inlined_call_operand.hbm [shape: f32[1,32], index: 11, kind: input, shape index: {}]
  %s12 = inlined_call_operand.hbm [shape: f32[2,8,32], index: 12, kind: output, shape index: {}]
  %s13 = sld [smem:[#allocation0]]
  $region129: #{tpu_custom_call.1} parent=0
    _
  %s15 = ssub.s32 1, %s13
  %s16 = scalar_select 0, %s15, %s13
  $region1: #{tpu_custom_call.1} parent=0
    #allocation2 [shape = 'u8[8192]{0}', space=vmem, size = 0x2000, scoped, tag = 'input window, operand 0']
    #allocation3 [shape = 's32[2]{0}', space=sflag, size = 0x8, scoped, tag = 'scoped memory for tpu_custom_call.1']
    #allocation4 [shape = 's32[2]{0}', space=sflag, size = 0x8, scoped, tag = 'scoped memory for tpu_custom_call.1']
    #allocation5 [shape = 'u8[8192]{0}', space=vmem, size = 0x2000, scoped, tag = 'input window, operand 1']
    #allocation6 [shape = 's32[2]{0}', space=sflag, size = 0x8, scoped, tag = 'scoped memory for tpu_custom_call.1']
    #allocation7 [shape = 'u8[8192]{0}', space=vmem, size = 0x2000, scoped, tag = 'input window, operand 2']
    #allocation8 [shape = 'u8[1024]{0}', space=vmem, size = 0x400, scoped, tag = 'input window, operand 3']
    #allocation9 [shape = 's32[2]{0}', space=sflag, size = 0x8, scoped, tag = 'scoped memory for tpu_custom_call.1']
    #allocation10 [shape = 'u8[65536]{0}', space=vmem, size = 0x10000, scoped, tag = 'input window, operand 4, single buffered']
    #allocation11 [shape = 'u8[2048]{0}', space=vmem, size = 0x800, scoped, tag = 'input window, operand 5, single buffered']
    #allocation12 [shape = 's32[1]{0}', space=sflag, size = 0x4, scoped, tag = 'scoped memory for tpu_custom_call.1']
    #allocation13 [shape = 'u8[65536]{0}', space=vmem, size = 0x10000, scoped, tag = 'input window, operand 6, single buffered']
    #allocation14 [shape = 'u8[2048]{0}', space=vmem, size = 0x800, scoped, tag = 'input window, operand 7, single buffered']
    #allocation15 [shape = 's32[1]{0}', space=sflag, size = 0x4, scoped, tag = 'scoped memory for tpu_custom_call.1']
    #allocation16 [shape = 'u8[65536]{0}', space=vmem, size = 0x10000, scoped, tag = 'input window, operand 8, single buffered']
    #allocation17 [shape = 'u8[2048]{0}', space=vmem, size = 0x800, scoped, tag = 'input window, operand 9, single buffered']
    #allocation18 [shape = 's32[1]{0}', space=sflag, size = 0x4, scoped, tag = 'scoped memory for tpu_custom_call.1']
    #allocation19 [shape = 'u8[16384]{0}', space=vmem, size = 0x4000, scoped, tag = 'input window, operand 10, single buffered']
    #allocation20 [shape = 'u8[512]{0}', space=vmem, size = 0x400, scoped, tag = 'input window, operand 11, single buffered']
    #allocation21 [shape = 's32[1]{0}', space=sflag, size = 0x4, scoped, tag = 'scoped memory for tpu_custom_call.1']
    #allocation22 [shape = 'u8[8192]{0}', space=vmem, size = 0x2000, scoped, tag = 'output window, operand 0']
    %17 = vsyncpa [#allocation3], 0
    %s18 = scalar_lea.sflag [#allocation3], 1
    %19 = vsyncpa %s18, 0
    %20 = vsyncpa [#allocation6], 0
    %s21 = scalar_lea.sflag [#allocation6], 1
    %22 = vsyncpa %s21, 0
    %23 = vsyncpa [#allocation9], 0
    %s24 = scalar_lea.sflag [#allocation9], 1
    %25 = vsyncpa %s24, 0
    %26 = vsyncpa [#allocation12], 0
    %27 = vsyncpa [#allocation15], 0
    %28 = vsyncpa [#allocation18], 0
    %29 = vsyncpa [#allocation21], 0
    %30 = vsyncpa [#allocation4], 0
    %s31 = scalar_lea.sflag [#allocation4], 1
    %32 = vsyncpa %s31, 0
    loop: start=0, step=1, limit=4
    $region2: #{tpu_custom_call.1} parent=1 // loop_pre_header
      _
    $region3: #{tpu_custom_call.1} parent=1 // loop_header
      %s34 = sphi 0, %s38
      %p35 = scmp.ge.s32.totalorder %s34, 4
      %s41 = sphi 0, %s53
      %s42 = sphi 0, %s49
      %s43 = sphi 0, %s41
      %s44 = sphi 0, %s42
      %s45 = sphi 0, %s43
      %s46 = sphi 0, %s44
      %s58 = sphi 0, %s60
      %s61 = sphi 0, %s58
      %s62 = sphi 0, %s61
      %s78 = sphi 0, %s62
      %s84 = sphi 0, %s86
      %s87 = sphi 0, %s84
      %s88 = sphi 0, %s87
      %s104 = sphi 0, %s88
      %s110 = sphi 0, %s112
      %s113 = sphi 0, %s110
      %s114 = sphi 0, %s113
      %s130 = sphi 0, %s114
      %s136 = sphi 0, %s138
      %s139 = sphi 0, %s136
      %s140 = sphi 0, %s139
      %s156 = sphi 0, %s140
      %s160 = sphi 0, %s160
      %s162 = sphi 0, %s160
      %s163 = sphi 0, %s162
      %s177 = sphi 0, %s163
      %s181 = sphi 0, %s181
      %s183 = sphi 0, %s181
      %s184 = sphi 0, %s183
      %s198 = sphi 0, %s184
      %s202 = sphi 0, %s202
      %s204 = sphi 0, %s202
      %s205 = sphi 0, %s204
      %s219 = sphi 0, %s205
      %s223 = sphi 0, %s223
      %s225 = sphi 0, %s223
      %s226 = sphi 0, %s225
      %s240 = sphi 0, %s226
      %s244 = sphi 0, %s244
      %s246 = sphi 0, %s244
      %s247 = sphi 0, %s246
      %s261 = sphi 0, %s247
      %s265 = sphi 0, %s265
      %s267 = sphi 0, %s265
      %s268 = sphi 0, %s267
      %s282 = sphi 0, %s268
      %s286 = sphi 0, %s286
      %s288 = sphi 0, %s286
      %s289 = sphi 0, %s288
      %s303 = sphi 0, %s289
      %s307 = sphi 0, %s307
      %s309 = sphi 0, %s307
      %s310 = sphi 0, %s309
      %s324 = sphi 0, %s310
      %s332 = sphi 0, %s334
      %s335 = sphi 0, %s332
      %s336 = sphi 0, %s335
      %s352 = sphi 0, %s336
    $region4: #{tpu_custom_call.1} parent=1 // loop_header_branch
      %37 = sbr.rel (%p35) target = $region8
    $region5: #{tpu_custom_call.1} parent=1 // loop_body
      %s39 = ssub.s32 %s34, 1
      %s40 = ssub.s32 %s34, 2
      %s47 = sadd.s32 1, %s42
      %p48 = scmp.ge.s32.totalorder %s47, 1
      %s49 = scalar_select %p48, 0, %s47
      %s50 = sadd.s32 1, %s41
      %s51 = scalar_select %p48, %s50, %s41
      %p52 = scmp.ge.s32.totalorder %s51, 2
      %s53 = scalar_select %p52, 0, %s51
      %s54 = ssub.s32 %s41, %s53
      %s55 = ssub.s32 %s42, %s49
      %s56 = sor.u32 %s54, %s55
      %p57 = scmp.eq.s32.totalorder %s56, 0
      %s59 = sadd.s32 %s58, 1
      %s60 = scalar_select %p57, %s58, %s59
      %p63 = pneg %p57
      %p64 = scmp.eq.s32.totalorder %s34, 1
      %p65 = por %p63, %p64
      %p66 = scmp.ne.s32.totalorder %s58, %s61
      %p67 = scmp.eq.s32.totalorder %s34, 0
      %p68 = por %p66, %p67
      %p69 = scmp.ne.s32.totalorder %s58, %s61
      %p70 = scmp.eq.s32.totalorder %s39, 1
      %p71 = por %p69, %p70
      %p72 = scmp.ne.s32.totalorder %s61, %s62
      %p73 = scmp.eq.s32.totalorder %s39, 0
      %p74 = por %p72, %p73
      %p75 = scmp.ne.s32.totalorder %s61, %s62
      %p76 = scmp.eq.s32.totalorder %s40, 1
      %p77 = por %p75, %p76
      %p79 = scmp.ne.s32.totalorder %s62, %s78
      %p80 = scmp.eq.s32.totalorder %s40, 0
      %p81 = por %p79, %p80
      %s82 = ssub.s32 %s41, %s53
      %p83 = scmp.eq.s32.totalorder %s82, 0
      %s85 = sadd.s32 %s84, 1
      %s86 = scalar_select %p83, %s84, %s85
      %p89 = pneg %p83
      %p90 = scmp.eq.s32.totalorder %s34, 1
      %p91 = por %p89, %p90
      %p92 = scmp.ne.s32.totalorder %s84, %s87
      %p93 = scmp.eq.s32.totalorder %s34, 0
      %p94 = por %p92, %p93
      %p95 = scmp.ne.s32.totalorder %s84, %s87
      %p96 = scmp.eq.s32.totalorder %s39, 1
      %p97 = por %p95, %p96
      %p98 = scmp.ne.s32.totalorder %s87, %s88
      %p99 = scmp.eq.s32.totalorder %s39, 0
      %p100 = por %p98, %p99
      %p101 = scmp.ne.s32.totalorder %s87, %s88
      %p102 = scmp.eq.s32.totalorder %s40, 1
      %p103 = por %p101, %p102
      %p105 = scmp.ne.s32.totalorder %s88, %s104
      %p106 = scmp.eq.s32.totalorder %s40, 0
      %p107 = por %p105, %p106
      %s108 = ssub.s32 %s41, %s53
      %p109 = scmp.eq.s32.totalorder %s108, 0
      %s111 = sadd.s32 %s110, 1
      %s112 = scalar_select %p109, %s110, %s111
      %p115 = pneg %p109
      %p116 = scmp.eq.s32.totalorder %s34, 1
      %p117 = por %p115, %p116
      %p118 = scmp.ne.s32.totalorder %s110, %s113
      %p119 = scmp.eq.s32.totalorder %s34, 0
      %p120 = por %p118, %p119
      %p121 = scmp.ne.s32.totalorder %s110, %s113
      %p122 = scmp.eq.s32.totalorder %s39, 1
      %p123 = por %p121, %p122
      %p124 = scmp.ne.s32.totalorder %s113, %s114
      %p125 = scmp.eq.s32.totalorder %s39, 0
      %p126 = por %p124, %p125
      %p127 = scmp.ne.s32.totalorder %s113, %s114
      %p128 = scmp.eq.s32.totalorder %s40, 1
      %p129 = por %p127, %p128
      %p131 = scmp.ne.s32.totalorder %s114, %s130
      %p132 = scmp.eq.s32.totalorder %s40, 0
      %p133 = por %p131, %p132
      %s134 = ssub.s32 %s41, %s53
      %p135 = scmp.eq.s32.totalorder %s134, 0
      %s137 = sadd.s32 %s136, 1
      %s138 = scalar_select %p135, %s136, %s137
      %p141 = pneg %p135
      %p142 = scmp.eq.s32.totalorder %s34, 1
      %p143 = por %p141, %p142
      %p144 = scmp.ne.s32.totalorder %s136, %s139
      %p145 = scmp.eq.s32.totalorder %s34, 0
      %p146 = por %p144, %p145
      %p147 = scmp.ne.s32.totalorder %s136, %s139
      %p148 = scmp.eq.s32.totalorder %s39, 1
      %p149 = por %p147, %p148
      %p150 = scmp.ne.s32.totalorder %s139, %s140
      %p151 = scmp.eq.s32.totalorder %s39, 0
      %p152 = por %p150, %p151
      %p153 = scmp.ne.s32.totalorder %s139, %s140
      %p154 = scmp.eq.s32.totalorder %s40, 1
      %p155 = por %p153, %p154
      %p157 = scmp.ne.s32.totalorder %s140, %s156
      %p158 = scmp.eq.s32.totalorder %s40, 0
      %p159 = por %p157, %p158
      %s161 = sadd.s32 %s160, 1
      %p164 = scmp.eq.s32.totalorder %s34, 1
      %p165 = scmp.ne.s32.totalorder %s160, %s162
      %p166 = scmp.eq.s32.totalorder %s34, 0
      %p167 = por %p165, %p166
      %p168 = scmp.ne.s32.totalorder %s160, %s162
      %p169 = scmp.eq.s32.totalorder %s39, 1
      %p170 = por %p168, %p169
      %p171 = scmp.ne.s32.totalorder %s162, %s163
      %p172 = scmp.eq.s32.totalorder %s39, 0
      %p173 = por %p171, %p172
      %p174 = scmp.ne.s32.totalorder %s162, %s163
      %p175 = scmp.eq.s32.totalorder %s40, 1
      %p176 = por %p174, %p175
      %p178 = scmp.ne.s32.totalorder %s163, %s177
      %p179 = scmp.eq.s32.totalorder %s40, 0
      %p180 = por %p178, %p179
      %s182 = sadd.s32 %s181, 1
      %p185 = scmp.eq.s32.totalorder %s34, 1
      %p186 = scmp.ne.s32.totalorder %s181, %s183
      %p187 = scmp.eq.s32.totalorder %s34, 0
      %p188 = por %p186, %p187
      %p189 = scmp.ne.s32.totalorder %s181, %s183
      %p190 = scmp.eq.s32.totalorder %s39, 1
      %p191 = por %p189, %p190
      %p192 = scmp.ne.s32.totalorder %s183, %s184
      %p193 = scmp.eq.s32.totalorder %s39, 0
      %p194 = por %p192, %p193
      %p195 = scmp.ne.s32.totalorder %s183, %s184
      %p196 = scmp.eq.s32.totalorder %s40, 1
      %p197 = por %p195, %p196
      %p199 = scmp.ne.s32.totalorder %s184, %s198
      %p200 = scmp.eq.s32.totalorder %s40, 0
      %p201 = por %p199, %p200
      %s203 = sadd.s32 %s202, 1
      %p206 = scmp.eq.s32.totalorder %s34, 1
      %p207 = scmp.ne.s32.totalorder %s202, %s204
      %p208 = scmp.eq.s32.totalorder %s34, 0
      %p209 = por %p207, %p208
      %p210 = scmp.ne.s32.totalorder %s202, %s204
      %p211 = scmp.eq.s32.totalorder %s39, 1
      %p212 = por %p210, %p211
      %p213 = scmp.ne.s32.totalorder %s204, %s205
      %p214 = scmp.eq.s32.totalorder %s39, 0
      %p215 = por %p213, %p214
      %p216 = scmp.ne.s32.totalorder %s204, %s205
      %p217 = scmp.eq.s32.totalorder %s40, 1
      %p218 = por %p216, %p217
      %p220 = scmp.ne.s32.totalorder %s205, %s219
      %p221 = scmp.eq.s32.totalorder %s40, 0
      %p222 = por %p220, %p221
      %s224 = sadd.s32 %s223, 1
      %p227 = scmp.eq.s32.totalorder %s34, 1
      %p228 = scmp.ne.s32.totalorder %s223, %s225
      %p229 = scmp.eq.s32.totalorder %s34, 0
      %p230 = por %p228, %p229
      %p231 = scmp.ne.s32.totalorder %s223, %s225
      %p232 = scmp.eq.s32.totalorder %s39, 1
      %p233 = por %p231, %p232
      %p234 = scmp.ne.s32.totalorder %s225, %s226
      %p235 = scmp.eq.s32.totalorder %s39, 0
      %p236 = por %p234, %p235
      %p237 = scmp.ne.s32.totalorder %s225, %s226
      %p238 = scmp.eq.s32.totalorder %s40, 1
      %p239 = por %p237, %p238
      %p241 = scmp.ne.s32.totalorder %s226, %s240
      %p242 = scmp.eq.s32.totalorder %s40, 0
      %p243 = por %p241, %p242
      %s245 = sadd.s32 %s244, 1
      %p248 = scmp.eq.s32.totalorder %s34, 1
      %p249 = scmp.ne.s32.totalorder %s244, %s246
      %p250 = scmp.eq.s32.totalorder %s34, 0
      %p251 = por %p249, %p250
      %p252 = scmp.ne.s32.totalorder %s244, %s246
      %p253 = scmp.eq.s32.totalorder %s39, 1
      %p254 = por %p252, %p253
      %p255 = scmp.ne.s32.totalorder %s246, %s247
      %p256 = scmp.eq.s32.totalorder %s39, 0
      %p257 = por %p255, %p256
      %p258 = scmp.ne.s32.totalorder %s246, %s247
      %p259 = scmp.eq.s32.totalorder %s40, 1
      %p260 = por %p258, %p259
      %p262 = scmp.ne.s32.totalorder %s247, %s261
      %p263 = scmp.eq.s32.totalorder %s40, 0
      %p264 = por %p262, %p263
      %s266 = sadd.s32 %s265, 1
      %p269 = scmp.eq.s32.totalorder %s34, 1
      %p270 = scmp.ne.s32.totalorder %s265, %s267
      %p271 = scmp.eq.s32.totalorder %s34, 0
      %p272 = por %p270, %p271
      %p273 = scmp.ne.s32.totalorder %s265, %s267
      %p274 = scmp.eq.s32.totalorder %s39, 1
      %p275 = por %p273, %p274
      %p276 = scmp.ne.s32.totalorder %s267, %s268
      %p277 = scmp.eq.s32.totalorder %s39, 0
      %p278 = por %p276, %p277
      %p279 = scmp.ne.s32.totalorder %s267, %s268
      %p280 = scmp.eq.s32.totalorder %s40, 1
      %p281 = por %p279, %p280
      %p283 = scmp.ne.s32.totalorder %s268, %s282
      %p284 = scmp.eq.s32.totalorder %s40, 0
      %p285 = por %p283, %p284
      %s287 = sadd.s32 %s286, 1
      %p290 = scmp.eq.s32.totalorder %s34, 1
      %p291 = scmp.ne.s32.totalorder %s286, %s288
      %p292 = scmp.eq.s32.totalorder %s34, 0
      %p293 = por %p291, %p292
      %p294 = scmp.ne.s32.totalorder %s286, %s288
      %p295 = scmp.eq.s32.totalorder %s39, 1
      %p296 = por %p294, %p295
      %p297 = scmp.ne.s32.totalorder %s288, %s289
      %p298 = scmp.eq.s32.totalorder %s39, 0
      %p299 = por %p297, %p298
      %p300 = scmp.ne.s32.totalorder %s288, %s289
      %p301 = scmp.eq.s32.totalorder %s40, 1
      %p302 = por %p300, %p301
      %p304 = scmp.ne.s32.totalorder %s289, %s303
      %p305 = scmp.eq.s32.totalorder %s40, 0
      %p306 = por %p304, %p305
      %s308 = sadd.s32 %s307, 1
      %p311 = scmp.eq.s32.totalorder %s34, 1
      %p312 = scmp.ne.s32.totalorder %s307, %s309
      %p313 = scmp.eq.s32.totalorder %s34, 0
      %p314 = por %p312, %p313
      %p315 = scmp.ne.s32.totalorder %s307, %s309
      %p316 = scmp.eq.s32.totalorder %s39, 1
      %p317 = por %p315, %p316
      %p318 = scmp.ne.s32.totalorder %s309, %s310
      %p319 = scmp.eq.s32.totalorder %s39, 0
      %p320 = por %p318, %p319
      %p321 = scmp.ne.s32.totalorder %s309, %s310
      %p322 = scmp.eq.s32.totalorder %s40, 1
      %p323 = por %p321, %p322
      %p325 = scmp.ne.s32.totalorder %s310, %s324
      %p326 = scmp.eq.s32.totalorder %s40, 0
      %p327 = por %p325, %p326
      %s328 = ssub.s32 %s41, %s53
      %s329 = ssub.s32 %s42, %s49
      %s330 = sor.u32 %s328, %s329
      %p331 = scmp.eq.s32.totalorder %s330, 0
      %s333 = sadd.s32 %s332, 1
      %s334 = scalar_select %p331, %s332, %s333
      %p337 = pneg %p331
      %p338 = scmp.eq.s32.totalorder %s34, 1
      %p339 = por %p337, %p338
      %p340 = scmp.ne.s32.totalorder %s332, %s335
      %p341 = scmp.eq.s32.totalorder %s34, 0
      %p342 = por %p340, %p341
      %p343 = scmp.ne.s32.totalorder %s332, %s335
      %p344 = scmp.eq.s32.totalorder %s39, 1
      %p345 = por %p343, %p344
      %p346 = scmp.ne.s32.totalorder %s335, %s336
      %p347 = scmp.eq.s32.totalorder %s39, 0
      %p348 = por %p346, %p347
      %p349 = scmp.ne.s32.totalorder %s335, %s336
      %p350 = scmp.eq.s32.totalorder %s40, 1
      %p351 = por %p349, %p350
      %p353 = scmp.ne.s32.totalorder %s336, %s352
      %p354 = scmp.eq.s32.totalorder %s40, 0
      %p355 = por %p353, %p354
      %p356 = scmp.le.s32.totalorder 1, %s34
      %p357 = scmp.lt.s32.totalorder %s34, 3
      %p358 = pnand %p356, %p357
      %p359 = pneg %p358
      // Predicated region
      $region9: #{tpu_custom_call.1} parent=5 // pred_check
        _
      $region10: #{tpu_custom_call.1} parent=5 // pred_check_branch
        %361 = sbr.rel (%p358) target = $region12
      $region11: #{tpu_custom_call.1} parent=5 // pred_region
        %s362 = ssub.s32 %s34, 1
        // Predicated region
        $region13: #{tpu_custom_call.1} parent=11 // pred_check
          %p363 = pneg %p173
        $region14: #{tpu_custom_call.1} parent=11 // pred_check_branch
          %365 = sbr.rel (%p363) target = $region16
        $region15: #{tpu_custom_call.1} parent=11 // pred_region
          %s367 = ssub.s32 2048, 2048
          %368 = vsyncadd [#allocation9], %s367
          %s369 = sshll.u32 [#allocation10], 4
          %s370 = int_to_ptr.vmem [resolvable:$true] %s369
          %375 = dma.hbm_to_vmem [thread:$0]  %s4, 2048, %s370, [#allocation9], 128, 128, 8
        $region16: #{tpu_custom_call.1} parent=11 // pred_fallthru
          _
        // Predicated region
        $region17: #{tpu_custom_call.1} parent=11 // pred_check
          %p376 = pneg %p194
        $region18: #{tpu_custom_call.1} parent=11 // pred_check_branch
          %378 = sbr.rel (%p376) target = $region20
        $region19: #{tpu_custom_call.1} parent=11 // pred_region
          %s380 = ssub.s32 64, 64
          %381 = vsyncadd [#allocation12], %s380
          %s382 = sshll.u32 [#allocation11], 4
          %s383 = int_to_ptr.vmem [resolvable:$true] %s382
          %388 = dma.hbm_to_vmem [thread:$0]  %s5, 64, %s383, [#allocation12], 16, 16, 1
        $region20: #{tpu_custom_call.1} parent=11 // pred_fallthru
          _
        // Predicated region
        $region21: #{tpu_custom_call.1} parent=11 // pred_check
          %p389 = pneg %p215
        $region22: #{tpu_custom_call.1} parent=11 // pred_check_branch
          %391 = sbr.rel (%p389) target = $region24
        $region23: #{tpu_custom_call.1} parent=11 // pred_region
          %s393 = ssub.s32 2048, 2048
          %394 = vsyncadd [#allocation12], %s393
          %s395 = sshll.u32 [#allocation13], 4
          %s396 = int_to_ptr.vmem [resolvable:$true] %s395
          %401 = dma.hbm_to_vmem [thread:$0]  %s6, 2048, %s396, [#allocation12], 128, 128, 8
        $region24: #{tpu_custom_call.1} parent=11 // pred_fallthru
          _
        // Predicated region
        $region25: #{tpu_custom_call.1} parent=11 // pred_check
          %p402 = pneg %p236
        $region26: #{tpu_custom_call.1} parent=11 // pred_check_branch
          %404 = sbr.rel (%p402) target = $region28
        $region27: #{tpu_custom_call.1} parent=11 // pred_region
          %s406 = ssub.s32 64, 64
          %407 = vsyncadd [#allocation15], %s406
          %s408 = sshll.u32 [#allocation14], 4
          %s409 = int_to_ptr.vmem [resolvable:$true] %s408
          %414 = dma.hbm_to_vmem [thread:$0]  %s7, 64, %s409, [#allocation15], 16, 16, 1
        $region28: #{tpu_custom_call.1} parent=11 // pred_fallthru
          _
        // Predicated region
        $region29: #{tpu_custom_call.1} parent=11 // pred_check
          %p415 = pneg %p257
        $region30: #{tpu_custom_call.1} parent=11 // pred_check_branch
          %417 = sbr.rel (%p415) target = $region32
        $region31: #{tpu_custom_call.1} parent=11 // pred_region
          %s419 = ssub.s32 2048, 2048
          %420 = vsyncadd [#allocation15], %s419
          %s421 = sshll.u32 [#allocation16], 4
          %s422 = int_to_ptr.vmem [resolvable:$true] %s421
          %427 = dma.hbm_to_vmem [thread:$0]  %s8, 2048, %s422, [#allocation15], 128, 128, 8
        $region32: #{tpu_custom_call.1} parent=11 // pred_fallthru
          _
        // Predicated region
        $region33: #{tpu_custom_call.1} parent=11 // pred_check
          %p428 = pneg %p278
        $region34: #{tpu_custom_call.1} parent=11 // pred_check_branch
          %430 = sbr.rel (%p428) target = $region36
        $region35: #{tpu_custom_call.1} parent=11 // pred_region
          %s432 = ssub.s32 64, 64
          %433 = vsyncadd [#allocation18], %s432
          %s434 = sshll.u32 [#allocation17], 4
          %s435 = int_to_ptr.vmem [resolvable:$true] %s434
          %440 = dma.hbm_to_vmem [thread:$0]  %s9, 64, %s435, [#allocation18], 16, 16, 1
        $region36: #{tpu_custom_call.1} parent=11 // pred_fallthru
          _
        // Predicated region
        $region37: #{tpu_custom_call.1} parent=11 // pred_check
          %p441 = pneg %p299
        $region38: #{tpu_custom_call.1} parent=11 // pred_check_branch
          %443 = sbr.rel (%p441) target = $region40
        $region39: #{tpu_custom_call.1} parent=11 // pred_region
          %s445 = ssub.s32 512, 512
          %446 = vsyncadd [#allocation18], %s445
          %s447 = sshll.u32 [#allocation19], 4
          %s448 = int_to_ptr.vmem [resolvable:$true] %s447
          %453 = dma.hbm_to_vmem [thread:$0]  %s10, 512, %s448, [#allocation18], 128, 128, 8
        $region40: #{tpu_custom_call.1} parent=11 // pred_fallthru
          _
        // Predicated region
        $region41: #{tpu_custom_call.1} parent=11 // pred_check
          %p454 = pneg %p320
        $region42: #{tpu_custom_call.1} parent=11 // pred_check_branch
          %456 = sbr.rel (%p454) target = $region44
        $region43: #{tpu_custom_call.1} parent=11 // pred_region
          %s458 = ssub.s32 16, 16
          %459 = vsyncadd [#allocation21], %s458
          %s461 = sshll.u32 [#allocation20], 4
          %s462 = int_to_ptr.vmem [resolvable:$true] %s461
          %464 = dma.hbm_to_vmem [thread:$0]  %s11, 16, %s462, [#allocation21]
        $region44: #{tpu_custom_call.1} parent=11 // pred_fallthru
          _
      $region12: #{tpu_custom_call.1} parent=5 // pred_fallthru
        _
      %p465 = scmp.lt.s32.totalorder %s34, 2
      // Predicated region
      $region45: #{tpu_custom_call.1} parent=5 // pred_check
        %p466 = pneg %p465
      $region46: #{tpu_custom_call.1} parent=5 // pred_check_branch
        %468 = sbr.rel (%p466) target = $region48
      $region47: #{tpu_custom_call.1} parent=5 // pred_region
        // Predicated region
        $region49: #{tpu_custom_call.1} parent=47 // pred_check
          %p469 = pneg %p68
        $region50: #{tpu_custom_call.1} parent=47 // pred_check_branch
          %471 = sbr.rel (%p469) target = $region52
        $region51: #{tpu_custom_call.1} parent=47 // pred_region
          %s472 = sand.u32 %s58, 1
          %s473 = scalar_lea.sflag [#allocation3], %s472
          %s474 = sand.u32 %s58, 1
          %s475 = smul.addr %s474, 8
          %s476 = scalar_lea.vmem [#allocation2], %s475
          %s478 = ssub.s32 128, 128
          %479 = vsyncadd %s473, %s478
          %s480 = sadd.s32 %s42, %s41
          %s481 = smul.addr %s480, 128
          %s482 = scalar_lea.hbm %s0, %s481
          %s484 = sshll.u32 %s476, 4
          %s485 = int_to_ptr.vmem [resolvable:$true] %s484
          %487 = dma.hbm_to_vmem [thread:$0]  %s482, 128, %s485, %s473
        $region52: #{tpu_custom_call.1} parent=47 // pred_fallthru
          _
        // Predicated region
        $region53: #{tpu_custom_call.1} parent=47 // pred_check
          %p488 = pneg %p94
        $region54: #{tpu_custom_call.1} parent=47 // pred_check_branch
          %490 = sbr.rel (%p488) target = $region56
        $region55: #{tpu_custom_call.1} parent=47 // pred_region
          %s491 = sand.u32 %s34, 1
          %s492 = scalar_lea.sflag [#allocation6], %s491
          %s493 = sand.u32 %s84, 1
          %s494 = smul.addr %s493, 8
          %s495 = scalar_lea.vmem [#allocation5], %s494
          %s497 = ssub.s32 128, 128
          %498 = vsyncadd %s492, %s497
          %s499 = smul.addr %s41, 128
          %s500 = scalar_lea.hbm %s1, %s499
          %s502 = sshll.u32 %s495, 4
          %s503 = int_to_ptr.vmem [resolvable:$true] %s502
          %505 = dma.hbm_to_vmem [thread:$0]  %s500, 128, %s503, %s492
        $region56: #{tpu_custom_call.1} parent=47 // pred_fallthru
          _
        // Predicated region
        $region57: #{tpu_custom_call.1} parent=47 // pred_check
          %p506 = pneg %p120
        $region58: #{tpu_custom_call.1} parent=47 // pred_check_branch
          %508 = sbr.rel (%p506) target = $region60
        $region59: #{tpu_custom_call.1} parent=47 // pred_region
          %s509 = sand.u32 %s34, 1
          %s510 = scalar_lea.sflag [#allocation6], %s509
          %s511 = sand.u32 %s110, 1
          %s512 = smul.addr %s511, 8
          %s513 = scalar_lea.vmem [#allocation7], %s512
          %s515 = ssub.s32 128, 128
          %516 = vsyncadd %s510, %s515
          %s517 = smul.addr %s41, 128
          %s518 = scalar_lea.hbm %s2, %s517
          %s520 = sshll.u32 %s513, 4
          %s521 = int_to_ptr.vmem [resolvable:$true] %s520
          %523 = dma.hbm_to_vmem [thread:$0]  %s518, 128, %s521, %s510
        $region60: #{tpu_custom_call.1} parent=47 // pred_fallthru
          _
        // Predicated region
        $region61: #{tpu_custom_call.1} parent=47 // pred_check
          %p524 = pneg %p146
        $region62: #{tpu_custom_call.1} parent=47 // pred_check_branch
          %526 = sbr.rel (%p524) target = $region64
        $region63: #{tpu_custom_call.1} parent=47 // pred_region
          %s527 = sand.u32 %s34, 1
          %s528 = scalar_lea.sflag [#allocation9], %s527
          %s529 = sand.u32 %s136, 1
          %s530 = scalar_lea.vmem [#allocation8], %s529
          %s532 = ssub.s32 16, 16
          %533 = vsyncadd %s528, %s532
          %s534 = smul.addr %s41, 16
          %s535 = scalar_lea.hbm %s3, %s534
          %s537 = sshll.u32 %s530, 4
          %s538 = int_to_ptr.vmem [resolvable:$true] %s537
          %540 = dma.hbm_to_vmem [thread:$0]  %s535, 16, %s538, %s528
        $region64: #{tpu_custom_call.1} parent=47 // pred_fallthru
          _
      $region48: #{tpu_custom_call.1} parent=5 // pred_fallthru
        _
      %p541 = scmp.le.s32.totalorder 1, %s34
      %p542 = scmp.lt.s32.totalorder %s34, 3
      %p543 = pnand %p541, %p542
      %p544 = pneg %p543
      // Predicated region
      $region65: #{tpu_custom_call.1} parent=5 // pred_check
        _
      $region66: #{tpu_custom_call.1} parent=5 // pred_check_branch
        %546 = sbr.rel (%p543) target = $region68
      $region67: #{tpu_custom_call.1} parent=5 // pred_region
        %s547 = ssub.s32 %s34, 1
        %s548 = sand.u32 %s61, 1
        %s549 = scalar_lea.sflag [#allocation3], %s548
        %s550 = sand.u32 %s61, 1
        %s551 = smul.addr %s550, 8
        %s552 = scalar_lea.vmem [#allocation2], %s551
        // Predicated region
        $region69: #{tpu_custom_call.1} parent=67 // pred_check
          %p553 = pneg %p74
        $region70: #{tpu_custom_call.1} parent=67 // pred_check_branch
          %555 = sbr.rel (%p553) target = $region72
        $region71: #{tpu_custom_call.1} parent=67 // pred_region
          %556 = dma.done %s549, 128
        $region72: #{tpu_custom_call.1} parent=67 // pred_fallthru
          _
        %s557 = sand.u32 %s39, 1
        %s558 = scalar_lea.sflag [#allocation6], %s557
        %s559 = sand.u32 %s87, 1
        %s560 = smul.addr %s559, 8
        %s561 = scalar_lea.vmem [#allocation5], %s560
        // Predicated region
        $region73: #{tpu_custom_call.1} parent=67 // pred_check
          %p562 = pneg %p100
        $region74: #{tpu_custom_call.1} parent=67 // pred_check_branch
          %564 = sbr.rel (%p562) target = $region76
        $region75: #{tpu_custom_call.1} parent=67 // pred_region
          %565 = dma.done %s558, 128
        $region76: #{tpu_custom_call.1} parent=67 // pred_fallthru
          _
        %s566 = sand.u32 %s39, 1
        %s567 = scalar_lea.sflag [#allocation6], %s566
        %s568 = sand.u32 %s113, 1
        %s569 = smul.addr %s568, 8
        %s570 = scalar_lea.vmem [#allocation7], %s569
        // Predicated region
        $region77: #{tpu_custom_call.1} parent=67 // pred_check
          %p571 = pneg %p126
        $region78: #{tpu_custom_call.1} parent=67 // pred_check_branch
          %573 = sbr.rel (%p571) target = $region80
        $region79: #{tpu_custom_call.1} parent=67 // pred_region
          %574 = dma.done %s567, 128
        $region80: #{tpu_custom_call.1} parent=67 // pred_fallthru
          _
        %s575 = sand.u32 %s39, 1
        %s576 = scalar_lea.sflag [#allocation9], %s575
        %s577 = sand.u32 %s139, 1
        %s578 = scalar_lea.vmem [#allocation8], %s577
        // Predicated region
        $region81: #{tpu_custom_call.1} parent=67 // pred_check
          %p579 = pneg %p152
        $region82: #{tpu_custom_call.1} parent=67 // pred_check_branch
          %581 = sbr.rel (%p579) target = $region84
        $region83: #{tpu_custom_call.1} parent=67 // pred_region
          %582 = dma.done %s576, 16
        $region84: #{tpu_custom_call.1} parent=67 // pred_fallthru
          _
        // Predicated region
        $region85: #{tpu_custom_call.1} parent=67 // pred_check
          %p583 = pneg %p173
        $region86: #{tpu_custom_call.1} parent=67 // pred_check_branch
          %585 = sbr.rel (%p583) target = $region88
        $region87: #{tpu_custom_call.1} parent=67 // pred_region
          %586 = dma.done [#allocation9], 2048
        $region88: #{tpu_custom_call.1} parent=67 // pred_fallthru
          _
        // Predicated region
        $region89: #{tpu_custom_call.1} parent=67 // pred_check
          %p587 = pneg %p194
        $region90: #{tpu_custom_call.1} parent=67 // pred_check_branch
          %589 = sbr.rel (%p587) target = $region92
        $region91: #{tpu_custom_call.1} parent=67 // pred_region
          %590 = dma.done [#allocation12], 64
        $region92: #{tpu_custom_call.1} parent=67 // pred_fallthru
          _
        // Predicated region
        $region93: #{tpu_custom_call.1} parent=67 // pred_check
          %p591 = pneg %p215
        $region94: #{tpu_custom_call.1} parent=67 // pred_check_branch
          %593 = sbr.rel (%p591) target = $region96
        $region95: #{tpu_custom_call.1} parent=67 // pred_region
          %594 = dma.done [#allocation12], 2048
        $region96: #{tpu_custom_call.1} parent=67 // pred_fallthru
          _
        // Predicated region
        $region97: #{tpu_custom_call.1} parent=67 // pred_check
          %p595 = pneg %p236
        $region98: #{tpu_custom_call.1} parent=67 // pred_check_branch
          %597 = sbr.rel (%p595) target = $region100
        $region99: #{tpu_custom_call.1} parent=67 // pred_region
          %598 = dma.done [#allocation15], 64
        $region100: #{tpu_custom_call.1} parent=67 // pred_fallthru
          _
        // Predicated region
        $region101: #{tpu_custom_call.1} parent=67 // pred_check
          %p599 = pneg %p257
        $region102: #{tpu_custom_call.1} parent=67 // pred_check_branch
          %601 = sbr.rel (%p599) target = $region104
        $region103: #{tpu_custom_call.1} parent=67 // pred_region
          %602 = dma.done [#allocation15], 2048
        $region104: #{tpu_custom_call.1} parent=67 // pred_fallthru
          _
        // Predicated region
        $region105: #{tpu_custom_call.1} parent=67 // pred_check
          %p603 = pneg %p278
        $region106: #{tpu_custom_call.1} parent=67 // pred_check_branch
          %605 = sbr.rel (%p603) target = $region108
        $region107: #{tpu_custom_call.1} parent=67 // pred_region
          %606 = dma.done [#allocation18], 64
        $region108: #{tpu_custom_call.1} parent=67 // pred_fallthru
          _
        // Predicated region
        $region109: #{tpu_custom_call.1} parent=67 // pred_check
          %p607 = pneg %p299
        $region110: #{tpu_custom_call.1} parent=67 // pred_check_branch
          %609 = sbr.rel (%p607) target = $region112
        $region111: #{tpu_custom_call.1} parent=67 // pred_region
          %610 = dma.done [#allocation18], 512
        $region112: #{tpu_custom_call.1} parent=67 // pred_fallthru
          _
        // Predicated region
        $region113: #{tpu_custom_call.1} parent=67 // pred_check
          %p611 = pneg %p320
        $region114: #{tpu_custom_call.1} parent=67 // pred_check_branch
          %613 = sbr.rel (%p611) target = $region116
        $region115: #{tpu_custom_call.1} parent=67 // pred_region
          %614 = dma.done [#allocation21], 16
        $region116: #{tpu_custom_call.1} parent=67 // pred_fallthru
          _
        %s615 = sand.u32 %s61, 1
        %s616 = scalar_lea.sflag [#allocation3], %s615
        %s617 = sand.u32 %s61, 1
        %s618 = smul.addr %s617, 8
        %s619 = scalar_lea.vmem [#allocation2], %s618
        %p620 = pneg %p74
        %p621 = pneg %p71
        %s622 = sand.u32 %s39, 1
        %s623 = scalar_lea.sflag [#allocation6], %s622
        %s624 = sand.u32 %s87, 1
        %s625 = smul.addr %s624, 8
        %s626 = scalar_lea.vmem [#allocation5], %s625
        %p627 = pneg %p100
        %p628 = pneg %p97
        %s629 = sand.u32 %s39, 1
        %s630 = scalar_lea.sflag [#allocation6], %s629
        %s631 = sand.u32 %s113, 1
        %s632 = smul.addr %s631, 8
        %s633 = scalar_lea.vmem [#allocation7], %s632
        %p634 = pneg %p126
        %p635 = pneg %p123
        %s636 = sand.u32 %s39, 1
        %s637 = scalar_lea.sflag [#allocation9], %s636
        %s638 = sand.u32 %s139, 1
        %s639 = scalar_lea.vmem [#allocation8], %s638
        %p640 = pneg %p152
        %p641 = pneg %p149
        %p642 = pneg %p173
        %p643 = pneg %p170
        %p644 = pneg %p194
        %p645 = pneg %p191
        %p646 = pneg %p215
        %p647 = pneg %p212
        %p648 = pneg %p236
        %p649 = pneg %p233
        %p650 = pneg %p257
        %p651 = pneg %p254
        %p652 = pneg %p278
        %p653 = pneg %p275
        %p654 = pneg %p299
        %p655 = pneg %p296
        %p656 = pneg %p320
        %p657 = pneg %p317
        %p658 = pneg %p348
        %p659 = pneg %p345
        %s660 = sand.u32 %s335, 1
        %s661 = scalar_lea.sflag [#allocation4], %s660
        %s662 = sand.u32 %s335, 1
        %s663 = smul.addr %s662, 8
        %s664 = scalar_lea.vmem [#allocation22], %s663
        %v666 = vld [vmem:[%s552] sm:$0xff]
        %v667 = vld [vmem:[%s561] sm:$0xff]
        %v668 = vld [vmem:[%s570] sm:$0xff]
        %v669 = vld [vmem:[%s578] sm:$0x1]
        %vm670 = vcmp.eq.s32.totalorder %v669, 0
        %v671 = vsel %vm670, -1e+20, 0.0
        %v672 = vld [vmem:[#allocation10] sm:$0xff]
        %v673 = vld [vmem:[#allocation10 + $0x8] sm:$0xff]
        %v674 = vld [vmem:[#allocation10 + $0x10] sm:$0xff]
        %v675 = vld [vmem:[#allocation10 + $0x18] sm:$0xff]
        %v676 = vld [vmem:[#allocation11] sm:$0x1]
        %v678 = vlaneseq
        %v679 = vshrl.u32 %v678, 7
        %v680 = vsub.s32 0, %v679
        %v681 = vrot.slane %v676, %v680
        %vm683 = vcmask 261120
        %v685 = vsel %vm683, %v666, 0
        %687 = vmatprep.subr.mxu0 0.0
        %688 = vmatpush1.msra.mxu0 %v672
        %689 = vmatprep.subr.mxu0 0.0
        %690 = vmatpush1.msra.mxu0 %v673
        %691 = vmatprep.subr.mxu0 0.0
        %692 = vmatpush1.msra.mxu0 %v674
        %693 = vmatprep.subr.mxu0 0.0
        %694 = vmatpush1.msra.mxu0 %v675
        %695 = vmatprep.subr.mxu0 0.0
        %696 = vmatpush1.msra.mxu0 0.0
        %697 = vmatprep.subr.mxu0 0.0
        %698 = vmatpush1.msra.mxu0 0.0
        %699 = vmatprep.subr.mxu0 0.0
        %700 = vmatpush1.msra.mxu0 0.0
        %701 = vmatprep.subr.mxu0 0.0
        %702 = vmatpush1.msra.mxu0 0.0
        %703 = vmatprep.subr.mxu0 0.0
        %704 = vmatpush1.msra.mxu0 0.0
        %705 = vmatprep.subr.mxu0 0.0
        %706 = vmatpush1.msra.mxu0 0.0
        %707 = vmatprep.subr.mxu0 0.0
        %708 = vmatpush1.msra.mxu0 0.0
        %709 = vmatprep.subr.mxu0 0.0
        %710 = vmatpush1.msra.mxu0 0.0
        %711 = vmatprep.subr.mxu0 0.0
        %712 = vmatpush1.msra.mxu0 0.0
        %713 = vmatprep.subr.mxu0 0.0
        %714 = vmatpush1.msra.mxu0 0.0
        %715 = vmatprep.subr.mxu0 0.0
        %716 = vmatpush1.msra.mxu0 0.0
        %717 = vmatprep.subr.mxu0 0.0
        %718 = vmatpush1.msra.mxu0 0.0
        %719 = vmatprep.subr.mxu0 0.0
        %720 = vmatpush1.msra.mxu0 0.0
        %721 = vmatprep.subr.mxu0 0.0
        %722 = vmatpush1.msra.mxu0 0.0
        %723 = vmatprep.subr.mxu0 0.0
        %724 = vmatpush1.msra.mxu0 0.0
        %725 = vmatprep.subr.mxu0 0.0
        %726 = vmatpush1.msra.mxu0 0.0
        %727 = vmatprep.subr.mxu0 0.0
        %728 = vmatpush1.msra.mxu0 0.0
        %729 = vmatprep.subr.mxu0 0.0
        %730 = vmatpush1.msra.mxu0 0.0
        %731 = vmatprep.subr.mxu0 0.0
        %732 = vmatpush1.msra.mxu0 0.0
        %733 = vmatprep.subr.mxu0 0.0
        %734 = vmatpush1.msra.mxu0 0.0
        %735 = vmatprep.subr.mxu0 0.0
        %736 = vmatpush1.msra.mxu0 0.0
        %737 = vmatprep.subr.mxu0 0.0
        %738 = vmatpush1.msra.mxu0 0.0
        %739 = vmatprep.subr.mxu0 0.0
        %740 = vmatpush1.msra.mxu0 0.0
        %741 = vmatprep.subr.mxu0 0.0
        %742 = vmatpush1.msra.mxu0 0.0
        %743 = vmatprep.subr.mxu0 0.0
        %744 = vmatpush1.msra.mxu0 0.0
        %745 = vmatprep.subr.mxu0 0.0
        %746 = vmatpush1.msra.mxu0 0.0
        %747 = vmatprep.subr.mxu0 0.0
        %748 = vmatpush1.msra.mxu0 0.0
        %749 = vmatprep.subr.mxu0 0.0
        %750 = vmatpush1.msra.mxu0 0.0
        %751 = vmatprep.mubr.f32.mxu0 0.0
        %752 = vmatmul.mubr.f32.gmra.mrb[0].mxu0 %v685
        %v753 = vpop.f32.mrb[0].mxu0
        %v754 = vadd.f32 %v681, %v753
        %v755 = vpop.f32.mrb[0].mxu0
        %756 = vdwg.mxu0
        %v757 = vld [vmem:[#allocation13] sm:$0xff]
        %v758 = vld [vmem:[#allocation13 + $0x8] sm:$0xff]
        %v759 = vld [vmem:[#allocation13 + $0x10] sm:$0xff]
        %v760 = vld [vmem:[#allocation13 + $0x18] sm:$0xff]
        %v761 = vld [vmem:[#allocation14] sm:$0x1]
        %v763 = vlaneseq
        %v764 = vshrl.u32 %v763, 7
        %v765 = vsub.s32 0, %v764
        %v766 = vrot.slane %v761, %v765
        %v769 = vsel %vm683, %v667, 0
        %771 = vmatprep.subr.mxu0 0.0
        %772 = vmatpush1.msra.mxu0 %v757
        %773 = vmatprep.subr.mxu0 0.0
        %774 = vmatpush1.msra.mxu0 %v758
        %775 = vmatprep.subr.mxu0 0.0
        %776 = vmatpush1.msra.mxu0 %v759
        %777 = vmatprep.subr.mxu0 0.0
        %778 = vmatpush1.msra.mxu0 %v760
        %779 = vmatprep.subr.mxu0 0.0
        %780 = vmatpush1.msra.mxu0 0.0
        %781 = vmatprep.subr.mxu0 0.0
        %782 = vmatpush1.msra.mxu0 0.0
        %783 = vmatprep.subr.mxu0 0.0
        %784 = vmatpush1.msra.mxu0 0.0
        %785 = vmatprep.subr.mxu0 0.0
        %786 = vmatpush1.msra.mxu0 0.0
        %787 = vmatprep.subr.mxu0 0.0
        %788 = vmatpush1.msra.mxu0 0.0
        %789 = vmatprep.subr.mxu0 0.0
        %790 = vmatpush1.msra.mxu0 0.0
        %791 = vmatprep.subr.mxu0 0.0
        %792 = vmatpush1.msra.mxu0 0.0
        %793 = vmatprep.subr.mxu0 0.0
        %794 = vmatpush1.msra.mxu0 0.0
        %795 = vmatprep.subr.mxu0 0.0
        %796 = vmatpush1.msra.mxu0 0.0
        %797 = vmatprep.subr.mxu0 0.0
        %798 = vmatpush1.msra.mxu0 0.0
        %799 = vmatprep.subr.mxu0 0.0
        %800 = vmatpush1.msra.mxu0 0.0
        %801 = vmatprep.subr.mxu0 0.0
        %802 = vmatpush1.msra.mxu0 0.0
        %803 = vmatprep.subr.mxu0 0.0
        %804 = vmatpush1.msra.mxu0 0.0
        %805 = vmatprep.subr.mxu0 0.0
        %806 = vmatpush1.msra.mxu0 0.0
        %807 = vmatprep.subr.mxu0 0.0
        %808 = vmatpush1.msra.mxu0 0.0
        %809 = vmatprep.subr.mxu0 0.0
        %810 = vmatpush1.msra.mxu0 0.0
        %811 = vmatprep.subr.mxu0 0.0
        %812 = vmatpush1.msra.mxu0 0.0
        %813 = vmatprep.subr.mxu0 0.0
        %814 = vmatpush1.msra.mxu0 0.0
        %815 = vmatprep.subr.mxu0 0.0
        %816 = vmatpush1.msra.mxu0 0.0
        %817 = vmatprep.subr.mxu0 0.0
        %818 = vmatpush1.msra.mxu0 0.0
        %819 = vmatprep.subr.mxu0 0.0
        %820 = vmatpush1.msra.mxu0 0.0
        %821 = vmatprep.subr.mxu0 0.0
        %822 = vmatpush1.msra.mxu0 0.0
        %823 = vmatprep.subr.mxu0 0.0
        %824 = vmatpush1.msra.mxu0 0.0
        %825 = vmatprep.subr.mxu0 0.0
        %826 = vmatpush1.msra.mxu0 0.0
        %827 = vmatprep.subr.mxu0 0.0
        %828 = vmatpush1.msra.mxu0 0.0
        %829 = vmatprep.subr.mxu0 0.0
        %830 = vmatpush1.msra.mxu0 0.0
        %831 = vmatprep.subr.mxu0 0.0
        %832 = vmatpush1.msra.mxu0 0.0
        %833 = vmatprep.subr.mxu0 0.0
        %834 = vmatpush1.msra.mxu0 0.0
        %835 = vmatprep.mubr.f32.mxu0 0.0
        %836 = vmatmul.mubr.f32.gmra.mrb[0].mxu0 %v769
        %v837 = vpop.f32.mrb[0].mxu0
        %v838 = vadd.f32 %v766, %v837
        %v839 = vpop.f32.mrb[0].mxu0
        %840 = vdwg.mxu0
        %v841 = vld [vmem:[#allocation16] sm:$0xff]
        %v842 = vld [vmem:[#allocation16 + $0x8] sm:$0xff]
        %v843 = vld [vmem:[#allocation16 + $0x10] sm:$0xff]
        %v844 = vld [vmem:[#allocation16 + $0x18] sm:$0xff]
        %v845 = vld [vmem:[#allocation17] sm:$0x1]
        %v847 = vlaneseq
        %v848 = vshrl.u32 %v847, 7
        %v849 = vsub.s32 0, %v848
        %v850 = vrot.slane %v845, %v849
        %v853 = vsel %vm683, %v668, 0
        %855 = vmatprep.subr.mxu0 0.0
        %856 = vmatpush1.msra.mxu0 %v841
        %857 = vmatprep.subr.mxu0 0.0
        %858 = vmatpush1.msra.mxu0 %v842
        %859 = vmatprep.subr.mxu0 0.0
        %860 = vmatpush1.msra.mxu0 %v843
        %861 = vmatprep.subr.mxu0 0.0
        %862 = vmatpush1.msra.mxu0 %v844
        %863 = vmatprep.subr.mxu0 0.0
        %864 = vmatpush1.msra.mxu0 0.0
        %865 = vmatprep.subr.mxu0 0.0
        %866 = vmatpush1.msra.mxu0 0.0
        %867 = vmatprep.subr.mxu0 0.0
        %868 = vmatpush1.msra.mxu0 0.0
        %869 = vmatprep.subr.mxu0 0.0
        %870 = vmatpush1.msra.mxu0 0.0
        %871 = vmatprep.subr.mxu0 0.0
        %872 = vmatpush1.msra.mxu0 0.0
        %873 = vmatprep.subr.mxu0 0.0
        %874 = vmatpush1.msra.mxu0 0.0
        %875 = vmatprep.subr.mxu0 0.0
        %876 = vmatpush1.msra.mxu0 0.0
        %877 = vmatprep.subr.mxu0 0.0
        %878 = vmatpush1.msra.mxu0 0.0
        %879 = vmatprep.subr.mxu0 0.0
        %880 = vmatpush1.msra.mxu0 0.0
        %881 = vmatprep.subr.mxu0 0.0
        %882 = vmatpush1.msra.mxu0 0.0
        %883 = vmatprep.subr.mxu0 0.0
        %884 = vmatpush1.msra.mxu0 0.0
        %885 = vmatprep.subr.mxu0 0.0
        %886 = vmatpush1.msra.mxu0 0.0
        %887 = vmatprep.subr.mxu0 0.0
        %888 = vmatpush1.msra.mxu0 0.0
        %889 = vmatprep.subr.mxu0 0.0
        %890 = vmatpush1.msra.mxu0 0.0
        %891 = vmatprep.subr.mxu0 0.0
        %892 = vmatpush1.msra.mxu0 0.0
        %893 = vmatprep.subr.mxu0 0.0
        %894 = vmatpush1.msra.mxu0 0.0
        %895 = vmatprep.subr.mxu0 0.0
        %896 = vmatpush1.msra.mxu0 0.0
        %897 = vmatprep.subr.mxu0 0.0
        %898 = vmatpush1.msra.mxu0 0.0
        %899 = vmatprep.subr.mxu0 0.0
        %900 = vmatpush1.msra.mxu0 0.0
        %901 = vmatprep.subr.mxu0 0.0
        %902 = vmatpush1.msra.mxu0 0.0
        %903 = vmatprep.subr.mxu0 0.0
        %904 = vmatpush1.msra.mxu0 0.0
        %905 = vmatprep.subr.mxu0 0.0
        %906 = vmatpush1.msra.mxu0 0.0
        %907 = vmatprep.subr.mxu0 0.0
        %908 = vmatpush1.msra.mxu0 0.0
        %909 = vmatprep.subr.mxu0 0.0
        %910 = vmatpush1.msra.mxu0 0.0
        %911 = vmatprep.subr.mxu0 0.0
        %912 = vmatpush1.msra.mxu0 0.0
        %913 = vmatprep.subr.mxu0 0.0
        %914 = vmatpush1.msra.mxu0 0.0
        %915 = vmatprep.subr.mxu0 0.0
        %916 = vmatpush1.msra.mxu0 0.0
        %917 = vmatprep.subr.mxu0 0.0
        %918 = vmatpush1.msra.mxu0 0.0
        %919 = vmatprep.mubr.f32.mxu0 0.0
        %920 = vmatmul.mubr.f32.gmra.mrb[0].mxu0 %v853
        %v921 = vpop.f32.mrb[0].mxu0
        %v922 = vadd.f32 %v850, %v921
        %v923 = vpop.f32.mrb[0].mxu0
        %924 = vdwg.mxu0
        %v925 = vpack.c.bf16 %v754, %v754
        %v926 = vpack.c.bf16 %v838, %v838
        %v928 = vlaneseq
        %v929 = vshrl.u32 %v928, 7
        %v930 = vsub.s32 0, %v929
        %v931 = vrot.slane %v671, %v930
        %vm933 = vcmask 64512
        %v935 = vsel %vm933, %v925, 0
        %v938 = vsel %vm933, %v926, 0
        %940 = vmatprep.subr.bf16.mxu0 0
        %941 = vmatpush1.bf16.xpose.msra.mxu0 %v938
        %942 = vmatprep.subr.bf16.mxu0 0
        %943 = vmatpush1.bf16.xpose.msra.mxu0 0
        %944 = vmatprep.subr.bf16.mxu0 0
        %945 = vmatpush1.bf16.xpose.msra.mxu0 0
        %946 = vmatprep.subr.bf16.mxu0 0
        %947 = vmatpush1.bf16.xpose.msra.mxu0 0
        %948 = vmatprep.subr.bf16.mxu0 0
        %949 = vmatpush1.bf16.xpose.msra.mxu0 0
        %950 = vmatprep.subr.bf16.mxu0 0
        %951 = vmatpush1.bf16.xpose.msra.mxu0 0
        %952 = vmatprep.subr.bf16.mxu0 0
        %953 = vmatpush1.bf16.xpose.msra.mxu0 0
        %954 = vmatprep.subr.bf16.mxu0 0
        %955 = vmatpush1.bf16.xpose.msra.mxu0 0
        %956 = vmatprep.subr.bf16.mxu0 0
        %957 = vmatpush1.bf16.xpose.msra.mxu0 0
        %958 = vmatprep.subr.bf16.mxu0 0
        %959 = vmatpush1.bf16.xpose.msra.mxu0 0
        %960 = vmatprep.subr.bf16.mxu0 0
        %961 = vmatpush1.bf16.xpose.msra.mxu0 0
        %962 = vmatprep.subr.bf16.mxu0 0
        %963 = vmatpush1.bf16.xpose.msra.mxu0 0
        %964 = vmatprep.subr.bf16.mxu0 0
        %965 = vmatpush1.bf16.xpose.msra.mxu0 0
        %966 = vmatprep.subr.bf16.mxu0 0
        %967 = vmatpush1.bf16.xpose.msra.mxu0 0
        %968 = vmatprep.subr.bf16.mxu0 0
        %969 = vmatpush1.bf16.xpose.msra.mxu0 0
        %970 = vmatprep.subr.bf16.mxu0 0
        %971 = vmatpush1.bf16.xpose.msra.mxu0 0
        %972 = vmatprep.mubr.bf16.mxu0 0
        %973 = vmatmul.mubr.bf16.gmra.mrb[0].mxu0 %v935
        %v974 = vpop.f32.mrb[0].mxu0
        %v975 = vadd.f32 %v931, %v974
        %v976 = vpop.f32.mrb[0].mxu0
        %v977 = vpop.f32.mrb[0].mxu0
        %v978 = vpop.f32.mrb[0].mxu0
        %979 = vdwg.mxu0
        %v980 = vsel %vm933, %v975, -inf
        %981 = vmax.xlane.f32.xlu0 %v980
        %v982 = vpop.xlane.xlu0 %981
        %v983 = vsub.f32 %v975, %v982
        %v984 = vmul.f32 %v983, 1.442695
        %v985 = vpow.pop %v984
        %v986 = vsel %vm933, %v985, 0.0
        %987 = vadd.xlane.f32.xlu0 %v986
        %v988 = vpop.xlane.xlu0 %987
        %v989 = vpack.c.bf16 %v985, %v985
        %v990 = vpack.c.bf16 %v922, %v922
        %v992 = vsel %vm933, %v989, 0
        %vm994 = vcmask 1043456
        %v996 = vsel %vm994, %v990, 0
        %998 = vmatprep.subr.bf16.mxu0 0
        %999 = vmatpush1.bf16.msra.mxu0 %v996
        %1000 = vmatprep.subr.bf16.mxu0 0
        %1001 = vmatpush1.bf16.msra.mxu0 0
        %1002 = vmatprep.subr.bf16.mxu0 0
        %1003 = vmatpush1.bf16.msra.mxu0 0
        %1004 = vmatprep.subr.bf16.mxu0 0
        %1005 = vmatpush1.bf16.msra.mxu0 0
        %1006 = vmatprep.subr.bf16.mxu0 0
        %1007 = vmatpush1.bf16.msra.mxu0 0
        %1008 = vmatprep.subr.bf16.mxu0 0
        %1009 = vmatpush1.bf16.msra.mxu0 0
        %1010 = vmatprep.subr.bf16.mxu0 0
        %1011 = vmatpush1.bf16.msra.mxu0 0
        %1012 = vmatprep.subr.bf16.mxu0 0
        %1013 = vmatpush1.bf16.msra.mxu0 0
        %1014 = vmatprep.subr.bf16.mxu0 0
        %1015 = vmatpush1.bf16.msra.mxu0 0
        %1016 = vmatprep.subr.bf16.mxu0 0
        %1017 = vmatpush1.bf16.msra.mxu0 0
        %1018 = vmatprep.subr.bf16.mxu0 0
        %1019 = vmatpush1.bf16.msra.mxu0 0
        %1020 = vmatprep.subr.bf16.mxu0 0
        %1021 = vmatpush1.bf16.msra.mxu0 0
        %1022 = vmatprep.subr.bf16.mxu0 0
        %1023 = vmatpush1.bf16.msra.mxu0 0
        %1024 = vmatprep.subr.bf16.mxu0 0
        %1025 = vmatpush1.bf16.msra.mxu0 0
        %1026 = vmatprep.subr.bf16.mxu0 0
        %1027 = vmatpush1.bf16.msra.mxu0 0
        %1028 = vmatprep.subr.bf16.mxu0 0
        %1029 = vmatpush1.bf16.msra.mxu0 0
        %1030 = vmatprep.mubr.bf16.mxu0 0
        %1031 = vmatmul.mubr.bf16.gmra.mrb[0].mxu0 %v992
        %v1032 = vpop.f32.mrb[0].mxu0
        %v1033 = vadd.f32 0.0, %v1032
        %v1034 = vpop.f32.mrb[0].mxu0
        %v1035 = vpop.f32.mrb[0].mxu0
        %v1036 = vpop.f32.mrb[0].mxu0
        %1037 = vdwg.mxu0
        %v1038 = vrcp.pop %v988
        %v1039 = vmul.f32 %v1033, %v1038
        %v1040 = vld [vmem:[#allocation19] sm:$0xff]
        %s1041 = scalar_lea.vmem [#allocation10], 32
        %v1042 = vld [vmem:[%s1041] sm:$0xff]
        %v1043 = vld [vmem:[%s1041 + $0x8] sm:$0xff]
        %v1044 = vld [vmem:[%s1041 + $0x10] sm:$0xff]
        %v1045 = vld [vmem:[%s1041 + $0x18] sm:$0xff]
        %s1046 = scalar_lea.vmem [#allocation11], 1
        %v1047 = vld [vmem:[%s1046] sm:$0x1]
        %v1049 = vlaneseq
        %v1050 = vshrl.u32 %v1049, 7
        %v1051 = vsub.s32 0, %v1050
        %v1052 = vrot.slane %v1047, %v1051
        %1054 = vmatprep.subr.mxu0 0.0
        %1055 = vmatpush1.msra.mxu0 %v1042
        %1056 = vmatprep.subr.mxu0 0.0
        %1057 = vmatpush1.msra.mxu0 %v1043
        %1058 = vmatprep.subr.mxu0 0.0
        %1059 = vmatpush1.msra.mxu0 %v1044
        %1060 = vmatprep.subr.mxu0 0.0
        %1061 = vmatpush1.msra.mxu0 %v1045
        %1062 = vmatprep.subr.mxu0 0.0
        %1063 = vmatpush1.msra.mxu0 0.0
        %1064 = vmatprep.subr.mxu0 0.0
        %1065 = vmatpush1.msra.mxu0 0.0
        %1066 = vmatprep.subr.mxu0 0.0
        %1067 = vmatpush1.msra.mxu0 0.0
        %1068 = vmatprep.subr.mxu0 0.0
        %1069 = vmatpush1.msra.mxu0 0.0
        %1070 = vmatprep.subr.mxu0 0.0
        %1071 = vmatpush1.msra.mxu0 0.0
        %1072 = vmatprep.subr.mxu0 0.0
        %1073 = vmatpush1.msra.mxu0 0.0
        %1074 = vmatprep.subr.mxu0 0.0
        %1075 = vmatpush1.msra.mxu0 0.0
        %1076 = vmatprep.subr.mxu0 0.0
        %1077 = vmatpush1.msra.mxu0 0.0
        %1078 = vmatprep.subr.mxu0 0.0
        %1079 = vmatpush1.msra.mxu0 0.0
        %1080 = vmatprep.subr.mxu0 0.0
        %1081 = vmatpush1.msra.mxu0 0.0
        %1082 = vmatprep.subr.mxu0 0.0
        %1083 = vmatpush1.msra.mxu0 0.0
        %1084 = vmatprep.subr.mxu0 0.0
        %1085 = vmatpush1.msra.mxu0 0.0
        %1086 = vmatprep.subr.mxu0 0.0
        %1087 = vmatpush1.msra.mxu0 0.0
        %1088 = vmatprep.subr.mxu0 0.0
        %1089 = vmatpush1.msra.mxu0 0.0
        %1090 = vmatprep.subr.mxu0 0.0
        %1091 = vmatpush1.msra.mxu0 0.0
        %1092 = vmatprep.subr.mxu0 0.0
        %1093 = vmatpush1.msra.mxu0 0.0
        %1094 = vmatprep.subr.mxu0 0.0
        %1095 = vmatpush1.msra.mxu0 0.0
        %1096 = vmatprep.subr.mxu0 0.0
        %1097 = vmatpush1.msra.mxu0 0.0
        %1098 = vmatprep.subr.mxu0 0.0
        %1099 = vmatpush1.msra.mxu0 0.0
        %1100 = vmatprep.subr.mxu0 0.0
        %1101 = vmatpush1.msra.mxu0 0.0
        %1102 = vmatprep.subr.mxu0 0.0
        %1103 = vmatpush1.msra.mxu0 0.0
        %1104 = vmatprep.subr.mxu0 0.0
        %1105 = vmatpush1.msra.mxu0 0.0
        %1106 = vmatprep.subr.mxu0 0.0
        %1107 = vmatpush1.msra.mxu0 0.0
        %1108 = vmatprep.subr.mxu0 0.0
        %1109 = vmatpush1.msra.mxu0 0.0
        %1110 = vmatprep.subr.mxu0 0.0
        %1111 = vmatpush1.msra.mxu0 0.0
        %1112 = vmatprep.subr.mxu0 0.0
        %1113 = vmatpush1.msra.mxu0 0.0
        %1114 = vmatprep.subr.mxu0 0.0
        %1115 = vmatpush1.msra.mxu0 0.0
        %1116 = vmatprep.subr.mxu0 0.0
        %1117 = vmatpush1.msra.mxu0 0.0
        %1118 = vmatprep.mubr.f32.mxu0 0.0
        %1119 = vmatmul.mubr.f32.gmra.mrb[0].mxu0 %v685
        %v1120 = vpop.f32.mrb[0].mxu0
        %v1121 = vadd.f32 %v1052, %v1120
        %v1122 = vpop.f32.mrb[0].mxu0
        %1123 = vdwg.mxu0
        %s1124 = scalar_lea.vmem [#allocation13], 32
        %v1125 = vld [vmem:[%s1124] sm:$0xff]
        %v1126 = vld [vmem:[%s1124 + $0x8] sm:$0xff]
        %v1127 = vld [vmem:[%s1124 + $0x10] sm:$0xff]
        %v1128 = vld [vmem:[%s1124 + $0x18] sm:$0xff]
        %s1129 = scalar_lea.vmem [#allocation14], 1
        %v1130 = vld [vmem:[%s1129] sm:$0x1]
        %v1132 = vlaneseq
        %v1133 = vshrl.u32 %v1132, 7
        %v1134 = vsub.s32 0, %v1133
        %v1135 = vrot.slane %v1130, %v1134
        %1137 = vmatprep.subr.mxu0 0.0
        %1138 = vmatpush1.msra.mxu0 %v1125
        %1139 = vmatprep.subr.mxu0 0.0
        %1140 = vmatpush1.msra.mxu0 %v1126
        %1141 = vmatprep.subr.mxu0 0.0
        %1142 = vmatpush1.msra.mxu0 %v1127
        %1143 = vmatprep.subr.mxu0 0.0
        %1144 = vmatpush1.msra.mxu0 %v1128
        %1145 = vmatprep.subr.mxu0 0.0
        %1146 = vmatpush1.msra.mxu0 0.0
        %1147 = vmatprep.subr.mxu0 0.0
        %1148 = vmatpush1.msra.mxu0 0.0
        %1149 = vmatprep.subr.mxu0 0.0
        %1150 = vmatpush1.msra.mxu0 0.0
        %1151 = vmatprep.subr.mxu0 0.0
        %1152 = vmatpush1.msra.mxu0 0.0
        %1153 = vmatprep.subr.mxu0 0.0
        %1154 = vmatpush1.msra.mxu0 0.0
        %1155 = vmatprep.subr.mxu0 0.0
        %1156 = vmatpush1.msra.mxu0 0.0
        %1157 = vmatprep.subr.mxu0 0.0
        %1158 = vmatpush1.msra.mxu0 0.0
        %1159 = vmatprep.subr.mxu0 0.0
        %1160 = vmatpush1.msra.mxu0 0.0
        %1161 = vmatprep.subr.mxu0 0.0
        %1162 = vmatpush1.msra.mxu0 0.0
        %1163 = vmatprep.subr.mxu0 0.0
        %1164 = vmatpush1.msra.mxu0 0.0
        %1165 = vmatprep.subr.mxu0 0.0
        %1166 = vmatpush1.msra.mxu0 0.0
        %1167 = vmatprep.subr.mxu0 0.0
        %1168 = vmatpush1.msra.mxu0 0.0
        %1169 = vmatprep.subr.mxu0 0.0
        %1170 = vmatpush1.msra.mxu0 0.0
        %1171 = vmatprep.subr.mxu0 0.0
        %1172 = vmatpush1.msra.mxu0 0.0
        %1173 = vmatprep.subr.mxu0 0.0
        %1174 = vmatpush1.msra.mxu0 0.0
        %1175 = vmatprep.subr.mxu0 0.0
        %1176 = vmatpush1.msra.mxu0 0.0
        %1177 = vmatprep.subr.mxu0 0.0
        %1178 = vmatpush1.msra.mxu0 0.0
        %1179 = vmatprep.subr.mxu0 0.0
        %1180 = vmatpush1.msra.mxu0 0.0
        %1181 = vmatprep.subr.mxu0 0.0
        %1182 = vmatpush1.msra.mxu0 0.0
        %1183 = vmatprep.subr.mxu0 0.0
        %1184 = vmatpush1.msra.mxu0 0.0
        %1185 = vmatprep.subr.mxu0 0.0
        %1186 = vmatpush1.msra.mxu0 0.0
        %1187 = vmatprep.subr.mxu0 0.0
        %1188 = vmatpush1.msra.mxu0 0.0
        %1189 = vmatprep.subr.mxu0 0.0
        %1190 = vmatpush1.msra.mxu0 0.0
        %1191 = vmatprep.subr.mxu0 0.0
        %1192 = vmatpush1.msra.mxu0 0.0
        %1193 = vmatprep.subr.mxu0 0.0
        %1194 = vmatpush1.msra.mxu0 0.0
        %1195 = vmatprep.subr.mxu0 0.0
        %1196 = vmatpush1.msra.mxu0 0.0
        %1197 = vmatprep.subr.mxu0 0.0
        %1198 = vmatpush1.msra.mxu0 0.0
        %1199 = vmatprep.subr.mxu0 0.0
        %1200 = vmatpush1.msra.mxu0 0.0
        %1201 = vmatprep.mubr.f32.mxu0 0.0
        %1202 = vmatmul.mubr.f32.gmra.mrb[0].mxu0 %v769
        %v1203 = vpop.f32.mrb[0].mxu0
        %v1204 = vadd.f32 %v1135, %v1203
        %v1205 = vpop.f32.mrb[0].mxu0
        %1206 = vdwg.mxu0
        %s1207 = scalar_lea.vmem [#allocation16], 32
        %v1208 = vld [vmem:[%s1207] sm:$0xff]
        %v1209 = vld [vmem:[%s1207 + $0x8] sm:$0xff]
        %v1210 = vld [vmem:[%s1207 + $0x10] sm:$0xff]
        %v1211 = vld [vmem:[%s1207 + $0x18] sm:$0xff]
        %s1212 = scalar_lea.vmem [#allocation17], 1
        %v1213 = vld [vmem:[%s1212] sm:$0x1]
        %v1215 = vlaneseq
        %v1216 = vshrl.u32 %v1215, 7
        %v1217 = vsub.s32 0, %v1216
        %v1218 = vrot.slane %v1213, %v1217
        %1220 = vmatprep.subr.mxu0 0.0
        %1221 = vmatpush1.msra.mxu0 %v1208
        %1222 = vmatprep.subr.mxu0 0.0
        %1223 = vmatpush1.msra.mxu0 %v1209
        %1224 = vmatprep.subr.mxu0 0.0
        %1225 = vmatpush1.msra.mxu0 %v1210
        %1226 = vmatprep.subr.mxu0 0.0
        %1227 = vmatpush1.msra.mxu0 %v1211
        %1228 = vmatprep.subr.mxu0 0.0
        %1229 = vmatpush1.msra.mxu0 0.0
        %1230 = vmatprep.subr.mxu0 0.0
        %1231 = vmatpush1.msra.mxu0 0.0
        %1232 = vmatprep.subr.mxu0 0.0
        %1233 = vmatpush1.msra.mxu0 0.0
        %1234 = vmatprep.subr.mxu0 0.0
        %1235 = vmatpush1.msra.mxu0 0.0
        %1236 = vmatprep.subr.mxu0 0.0
        %1237 = vmatpush1.msra.mxu0 0.0
        %1238 = vmatprep.subr.mxu0 0.0
        %1239 = vmatpush1.msra.mxu0 0.0
        %1240 = vmatprep.subr.mxu0 0.0
        %1241 = vmatpush1.msra.mxu0 0.0
        %1242 = vmatprep.subr.mxu0 0.0
        %1243 = vmatpush1.msra.mxu0 0.0
        %1244 = vmatprep.subr.mxu0 0.0
        %1245 = vmatpush1.msra.mxu0 0.0
        %1246 = vmatprep.subr.mxu0 0.0
        %1247 = vmatpush1.msra.mxu0 0.0
        %1248 = vmatprep.subr.mxu0 0.0
        %1249 = vmatpush1.msra.mxu0 0.0
        %1250 = vmatprep.subr.mxu0 0.0
        %1251 = vmatpush1.msra.mxu0 0.0
        %1252 = vmatprep.subr.mxu0 0.0
        %1253 = vmatpush1.msra.mxu0 0.0
        %1254 = vmatprep.subr.mxu0 0.0
        %1255 = vmatpush1.msra.mxu0 0.0
        %1256 = vmatprep.subr.mxu0 0.0
        %1257 = vmatpush1.msra.mxu0 0.0
        %1258 = vmatprep.subr.mxu0 0.0
        %1259 = vmatpush1.msra.mxu0 0.0
        %1260 = vmatprep.subr.mxu0 0.0
        %1261 = vmatpush1.msra.mxu0 0.0
        %1262 = vmatprep.subr.mxu0 0.0
        %1263 = vmatpush1.msra.mxu0 0.0
        %1264 = vmatprep.subr.mxu0 0.0
        %1265 = vmatpush1.msra.mxu0 0.0
        %1266 = vmatprep.subr.mxu0 0.0
        %1267 = vmatpush1.msra.mxu0 0.0
        %1268 = vmatprep.subr.mxu0 0.0
        %1269 = vmatpush1.msra.mxu0 0.0
        %1270 = vmatprep.subr.mxu0 0.0
        %1271 = vmatpush1.msra.mxu0 0.0
        %1272 = vmatprep.subr.mxu0 0.0
        %1273 = vmatpush1.msra.mxu0 0.0
        %1274 = vmatprep.subr.mxu0 0.0
        %1275 = vmatpush1.msra.mxu0 0.0
        %1276 = vmatprep.subr.mxu0 0.0
        %1277 = vmatpush1.msra.mxu0 0.0
        %1278 = vmatprep.subr.mxu0 0.0
        %1279 = vmatpush1.msra.mxu0 0.0
        %1280 = vmatprep.subr.mxu0 0.0
        %1281 = vmatpush1.msra.mxu0 0.0
        %1282 = vmatprep.subr.mxu0 0.0
        %1283 = vmatpush1.msra.mxu0 0.0
        %1284 = vmatprep.mubr.f32.mxu0 0.0
        %1285 = vmatmul.mubr.f32.gmra.mrb[0].mxu0 %v853
        %v1286 = vpop.f32.mrb[0].mxu0
        %v1287 = vadd.f32 %v1218, %v1286
        %v1288 = vpop.f32.mrb[0].mxu0
        %1289 = vdwg.mxu0
        %v1290 = vpack.c.bf16 %v1121, %v1121
        %v1291 = vpack.c.bf16 %v1204, %v1204
        %v1293 = vsel %vm933, %v1290, 0
        %v1296 = vsel %vm933, %v1291, 0
        %1298 = vmatprep.subr.bf16.mxu0 0
        %1299 = vmatpush1.bf16.xpose.msra.mxu0 %v1296
        %1300 = vmatprep.subr.bf16.mxu0 0
        %1301 = vmatpush1.bf16.xpose.msra.mxu0 0
        %1302 = vmatprep.subr.bf16.mxu0 0
        %1303 = vmatpush1.bf16.xpose.msra.mxu0 0
        %1304 = vmatprep.subr.bf16.mxu0 0
        %1305 = vmatpush1.bf16.xpose.msra.mxu0 0
        %1306 = vmatprep.subr.bf16.mxu0 0
        %1307 = vmatpush1.bf16.xpose.msra.mxu0 0
        %1308 = vmatprep.subr.bf16.mxu0 0
        %1309 = vmatpush1.bf16.xpose.msra.mxu0 0
        %1310 = vmatprep.subr.bf16.mxu0 0
        %1311 = vmatpush1.bf16.xpose.msra.mxu0 0
        %1312 = vmatprep.subr.bf16.mxu0 0
        %1313 = vmatpush1.bf16.xpose.msra.mxu0 0
        %1314 = vmatprep.subr.bf16.mxu0 0
        %1315 = vmatpush1.bf16.xpose.msra.mxu0 0
        %1316 = vmatprep.subr.bf16.mxu0 0
        %1317 = vmatpush1.bf16.xpose.msra.mxu0 0
        %1318 = vmatprep.subr.bf16.mxu0 0
        %1319 = vmatpush1.bf16.xpose.msra.mxu0 0
        %1320 = vmatprep.subr.bf16.mxu0 0
        %1321 = vmatpush1.bf16.xpose.msra.mxu0 0
        %1322 = vmatprep.subr.bf16.mxu0 0
        %1323 = vmatpush1.bf16.xpose.msra.mxu0 0
        %1324 = vmatprep.subr.bf16.mxu0 0
        %1325 = vmatpush1.bf16.xpose.msra.mxu0 0
        %1326 = vmatprep.subr.bf16.mxu0 0
        %1327 = vmatpush1.bf16.xpose.msra.mxu0 0
        %1328 = vmatprep.subr.bf16.mxu0 0
        %1329 = vmatpush1.bf16.xpose.msra.mxu0 0
        %1330 = vmatprep.mubr.bf16.mxu0 0
        %1331 = vmatmul.mubr.bf16.gmra.mrb[0].mxu0 %v1293
        %v1332 = vpop.f32.mrb[0].mxu0
        %v1333 = vadd.f32 %v931, %v1332
        %v1334 = vpop.f32.mrb[0].mxu0
        %v1335 = vpop.f32.mrb[0].mxu0
        %v1336 = vpop.f32.mrb[0].mxu0
        %1337 = vdwg.mxu0
        %v1338 = vsel %vm933, %v1333, -inf
        %1339 = vmax.xlane.f32.xlu0 %v1338
        %v1340 = vpop.xlane.xlu0 %1339
        %v1341 = vsub.f32 %v1333, %v1340
        %v1342 = vmul.f32 %v1341, 1.442695
        %v1343 = vpow.pop %v1342
        %v1344 = vsel %vm933, %v1343, 0.0
        %1345 = vadd.xlane.f32.xlu0 %v1344
        %v1346 = vpop.xlane.xlu0 %1345
        %v1347 = vpack.c.bf16 %v1343, %v1343
        %v1348 = vpack.c.bf16 %v1287, %v1287
        %v1350 = vsel %vm933, %v1347, 0
        %v1353 = vsel %vm994, %v1348, 0
        %1355 = vmatprep.subr.bf16.mxu0 0
        %1356 = vmatpush1.bf16.msra.mxu0 %v1353
        %1357 = vmatprep.subr.bf16.mxu0 0
        %1358 = vmatpush1.bf16.msra.mxu0 0
        %1359 = vmatprep.subr.bf16.mxu0 0
        %1360 = vmatpush1.bf16.msra.mxu0 0
        %1361 = vmatprep.subr.bf16.mxu0 0
        %1362 = vmatpush1.bf16.msra.mxu0 0
        %1363 = vmatprep.subr.bf16.mxu0 0
        %1364 = vmatpush1.bf16.msra.mxu0 0
        %1365 = vmatprep.subr.bf16.mxu0 0
        %1366 = vmatpush1.bf16.msra.mxu0 0
        %1367 = vmatprep.subr.bf16.mxu0 0
        %1368 = vmatpush1.bf16.msra.mxu0 0
        %1369 = vmatprep.subr.bf16.mxu0 0
        %1370 = vmatpush1.bf16.msra.mxu0 0
        %1371 = vmatprep.subr.bf16.mxu0 0
        %1372 = vmatpush1.bf16.msra.mxu0 0
        %1373 = vmatprep.subr.bf16.mxu0 0
        %1374 = vmatpush1.bf16.msra.mxu0 0
        %1375 = vmatprep.subr.bf16.mxu0 0
        %1376 = vmatpush1.bf16.msra.mxu0 0
        %1377 = vmatprep.subr.bf16.mxu0 0
        %1378 = vmatpush1.bf16.msra.mxu0 0
        %1379 = vmatprep.subr.bf16.mxu0 0
        %1380 = vmatpush1.bf16.msra.mxu0 0
        %1381 = vmatprep.subr.bf16.mxu0 0
        %1382 = vmatpush1.bf16.msra.mxu0 0
        %1383 = vmatprep.subr.bf16.mxu0 0
        %1384 = vmatpush1.bf16.msra.mxu0 0
        %1385 = vmatprep.subr.bf16.mxu0 0
        %1386 = vmatpush1.bf16.msra.mxu0 0
        %1387 = vmatprep.mubr.bf16.mxu0 0
        %1388 = vmatmul.mubr.bf16.gmra.mrb[0].mxu0 %v1350
        %v1389 = vpop.f32.mrb[0].mxu0
        %v1390 = vadd.f32 0.0, %v1389
        %v1391 = vpop.f32.mrb[0].mxu0
        %v1392 = vpop.f32.mrb[0].mxu0
        %v1393 = vpop.f32.mrb[0].mxu0
        %1394 = vdwg.mxu0
        %v1395 = vrcp.pop %v1346
        %v1396 = vmul.f32 %v1390, %v1395
        %s1397 = scalar_lea.vmem [#allocation19], 8
        %v1398 = vld [vmem:[%s1397] sm:$0xff]
        %v1400 = vsel %vm933, %v1396, 0
        %1402 = vmatprep.subr.mxu0 0.0
        %1403 = vmatpush1.msra.mxu0 %v1398
        %1404 = vmatprep.subr.mxu0 0.0
        %1405 = vmatpush1.msra.mxu0 0.0
        %1406 = vmatprep.subr.mxu0 0.0
        %1407 = vmatpush1.msra.mxu0 0.0
        %1408 = vmatprep.subr.mxu0 0.0
        %1409 = vmatpush1.msra.mxu0 0.0
        %1410 = vmatprep.subr.mxu0 0.0
        %1411 = vmatpush1.msra.mxu0 0.0
        %1412 = vmatprep.subr.mxu0 0.0
        %1413 = vmatpush1.msra.mxu0 0.0
        %1414 = vmatprep.subr.mxu0 0.0
        %1415 = vmatpush1.msra.mxu0 0.0
        %1416 = vmatprep.subr.mxu0 0.0
        %1417 = vmatpush1.msra.mxu0 0.0
        %1418 = vmatprep.subr.mxu0 0.0
        %1419 = vmatpush1.msra.mxu0 0.0
        %1420 = vmatprep.subr.mxu0 0.0
        %1421 = vmatpush1.msra.mxu0 0.0
        %1422 = vmatprep.subr.mxu0 0.0
        %1423 = vmatpush1.msra.mxu0 0.0
        %1424 = vmatprep.subr.mxu0 0.0
        %1425 = vmatpush1.msra.mxu0 0.0
        %1426 = vmatprep.subr.mxu0 0.0
        %1427 = vmatpush1.msra.mxu0 0.0
        %1428 = vmatprep.subr.mxu0 0.0
        %1429 = vmatpush1.msra.mxu0 0.0
        %1430 = vmatprep.subr.mxu0 0.0
        %1431 = vmatpush1.msra.mxu0 0.0
        %1432 = vmatprep.subr.mxu0 0.0
        %1433 = vmatpush1.msra.mxu0 0.0
        %1434 = vmatprep.subr.mxu0 0.0
        %1435 = vmatpush1.msra.mxu0 0.0
        %1436 = vmatprep.subr.mxu0 0.0
        %1437 = vmatpush1.msra.mxu0 0.0
        %1438 = vmatprep.subr.mxu0 0.0
        %1439 = vmatpush1.msra.mxu0 0.0
        %1440 = vmatprep.subr.mxu0 0.0
        %1441 = vmatpush1.msra.mxu0 0.0
        %1442 = vmatprep.subr.mxu0 0.0
        %1443 = vmatpush1.msra.mxu0 0.0
        %1444 = vmatprep.subr.mxu0 0.0
        %1445 = vmatpush1.msra.mxu0 0.0
        %1446 = vmatprep.subr.mxu0 0.0
        %1447 = vmatpush1.msra.mxu0 0.0
        %1448 = vmatprep.subr.mxu0 0.0
        %1449 = vmatpush1.msra.mxu0 0.0
        %1450 = vmatprep.subr.mxu0 0.0
        %1451 = vmatpush1.msra.mxu0 0.0
        %1452 = vmatprep.subr.mxu0 0.0
        %1453 = vmatpush1.msra.mxu0 0.0
        %1454 = vmatprep.subr.mxu0 0.0
        %1455 = vmatpush1.msra.mxu0 0.0
        %1456 = vmatprep.subr.mxu0 0.0
        %1457 = vmatpush1.msra.mxu0 0.0
        %1458 = vmatprep.subr.mxu0 0.0
        %1459 = vmatpush1.msra.mxu0 0.0
        %1460 = vmatprep.subr.mxu0 0.0
        %1461 = vmatpush1.msra.mxu0 0.0
        %1462 = vmatprep.subr.mxu0 0.0
        %1463 = vmatpush1.msra.mxu0 0.0
        %1464 = vmatprep.subr.mxu0 0.0
        %1465 = vmatpush1.msra.mxu0 0.0
        %1466 = vmatprep.mubr.f32.mxu0 0.0
        %1467 = vmatmul.mubr.f32.gmra.mrb[0].mxu0 %v1400
        %v1468 = vpop.f32.mrb[0].mxu0
        %v1469 = vadd.f32 0.0, %v1468
        %v1470 = vpop.f32.mrb[0].mxu0
        %1471 = vdwg.mxu0
        %v1473 = vsel %vm933, %v1039, 0
        %1475 = vmatprep.subr.mxu0 0.0
        %1476 = vmatpush1.msra.mxu0 %v1040
        %1477 = vmatprep.subr.mxu0 0.0
        %1478 = vmatpush1.msra.mxu0 0.0
        %1479 = vmatprep.subr.mxu0 0.0
        %1480 = vmatpush1.msra.mxu0 0.0
        %1481 = vmatprep.subr.mxu0 0.0
        %1482 = vmatpush1.msra.mxu0 0.0
        %1483 = vmatprep.subr.mxu0 0.0
        %1484 = vmatpush1.msra.mxu0 0.0
        %1485 = vmatprep.subr.mxu0 0.0
        %1486 = vmatpush1.msra.mxu0 0.0
        %1487 = vmatprep.subr.mxu0 0.0
        %1488 = vmatpush1.msra.mxu0 0.0
        %1489 = vmatprep.subr.mxu0 0.0
        %1490 = vmatpush1.msra.mxu0 0.0
        %1491 = vmatprep.subr.mxu0 0.0
        %1492 = vmatpush1.msra.mxu0 0.0
        %1493 = vmatprep.subr.mxu0 0.0
        %1494 = vmatpush1.msra.mxu0 0.0
        %1495 = vmatprep.subr.mxu0 0.0
        %1496 = vmatpush1.msra.mxu0 0.0
        %1497 = vmatprep.subr.mxu0 0.0
        %1498 = vmatpush1.msra.mxu0 0.0
        %1499 = vmatprep.subr.mxu0 0.0
        %1500 = vmatpush1.msra.mxu0 0.0
        %1501 = vmatprep.subr.mxu0 0.0
        %1502 = vmatpush1.msra.mxu0 0.0
        %1503 = vmatprep.subr.mxu0 0.0
        %1504 = vmatpush1.msra.mxu0 0.0
        %1505 = vmatprep.subr.mxu0 0.0
        %1506 = vmatpush1.msra.mxu0 0.0
        %1507 = vmatprep.subr.mxu0 0.0
        %1508 = vmatpush1.msra.mxu0 0.0
        %1509 = vmatprep.subr.mxu0 0.0
        %1510 = vmatpush1.msra.mxu0 0.0
        %1511 = vmatprep.subr.mxu0 0.0
        %1512 = vmatpush1.msra.mxu0 0.0
        %1513 = vmatprep.subr.mxu0 0.0
        %1514 = vmatpush1.msra.mxu0 0.0
        %1515 = vmatprep.subr.mxu0 0.0
        %1516 = vmatpush1.msra.mxu0 0.0
        %1517 = vmatprep.subr.mxu0 0.0
        %1518 = vmatpush1.msra.mxu0 0.0
        %1519 = vmatprep.subr.mxu0 0.0
        %1520 = vmatpush1.msra.mxu0 0.0
        %1521 = vmatprep.subr.mxu0 0.0
        %1522 = vmatpush1.msra.mxu0 0.0
        %1523 = vmatprep.subr.mxu0 0.0
        %1524 = vmatpush1.msra.mxu0 0.0
        %1525 = vmatprep.subr.mxu0 0.0
        %1526 = vmatpush1.msra.mxu0 0.0
        %1527 = vmatprep.subr.mxu0 0.0
        %1528 = vmatpush1.msra.mxu0 0.0
        %1529 = vmatprep.subr.mxu0 0.0
        %1530 = vmatpush1.msra.mxu0 0.0
        %1531 = vmatprep.subr.mxu0 0.0
        %1532 = vmatpush1.msra.mxu0 0.0
        %1533 = vmatprep.subr.mxu0 0.0
        %1534 = vmatpush1.msra.mxu0 0.0
        %1535 = vmatprep.subr.mxu0 0.0
        %1536 = vmatpush1.msra.mxu0 0.0
        %1537 = vmatprep.subr.mxu0 0.0
        %1538 = vmatpush1.msra.mxu0 0.0
        %1539 = vmatprep.mubr.f32.mxu0 0.0
        %1540 = vmatmul.mubr.f32.gmra.mrb[0].mxu0 %v1473
        %v1541 = vpop.f32.mrb[0].mxu0
        %v1542 = vadd.f32 %v1469, %v1541
        %v1543 = vpop.f32.mrb[0].mxu0
        %1544 = vdwg.mxu0
        %s1545 = scalar_lea.vmem [#allocation10], 64
        %v1546 = vld [vmem:[%s1545] sm:$0xff]
        %v1547 = vld [vmem:[%s1545 + $0x8] sm:$0xff]
        %v1548 = vld [vmem:[%s1545 + $0x10] sm:$0xff]
        %v1549 = vld [vmem:[%s1545 + $0x18] sm:$0xff]
        %s1550 = scalar_lea.vmem [#allocation11], 2
        %v1551 = vld [vmem:[%s1550] sm:$0x1]
        %v1553 = vlaneseq
        %v1554 = vshrl.u32 %v1553, 7
        %v1555 = vsub.s32 0, %v1554
        %v1556 = vrot.slane %v1551, %v1555
        %1558 = vmatprep.subr.mxu0 0.0
        %1559 = vmatpush1.msra.mxu0 %v1546
        %1560 = vmatprep.subr.mxu0 0.0
        %1561 = vmatpush1.msra.mxu0 %v1547
        %1562 = vmatprep.subr.mxu0 0.0
        %1563 = vmatpush1.msra.mxu0 %v1548
        %1564 = vmatprep.subr.mxu0 0.0
        %1565 = vmatpush1.msra.mxu0 %v1549
        %1566 = vmatprep.subr.mxu0 0.0
        %1567 = vmatpush1.msra.mxu0 0.0
        %1568 = vmatprep.subr.mxu0 0.0
        %1569 = vmatpush1.msra.mxu0 0.0
        %1570 = vmatprep.subr.mxu0 0.0
        %1571 = vmatpush1.msra.mxu0 0.0
        %1572 = vmatprep.subr.mxu0 0.0
        %1573 = vmatpush1.msra.mxu0 0.0
        %1574 = vmatprep.subr.mxu0 0.0
        %1575 = vmatpush1.msra.mxu0 0.0
        %1576 = vmatprep.subr.mxu0 0.0
        %1577 = vmatpush1.msra.mxu0 0.0
        %1578 = vmatprep.subr.mxu0 0.0
        %1579 = vmatpush1.msra.mxu0 0.0
        %1580 = vmatprep.subr.mxu0 0.0
        %1581 = vmatpush1.msra.mxu0 0.0
        %1582 = vmatprep.subr.mxu0 0.0
        %1583 = vmatpush1.msra.mxu0 0.0
        %1584 = vmatprep.subr.mxu0 0.0
        %1585 = vmatpush1.msra.mxu0 0.0
        %1586 = vmatprep.subr.mxu0 0.0
        %1587 = vmatpush1.msra.mxu0 0.0
        %1588 = vmatprep.subr.mxu0 0.0
        %1589 = vmatpush1.msra.mxu0 0.0
        %1590 = vmatprep.subr.mxu0 0.0
        %1591 = vmatpush1.msra.mxu0 0.0
        %1592 = vmatprep.subr.mxu0 0.0
        %1593 = vmatpush1.msra.mxu0 0.0
        %1594 = vmatprep.subr.mxu0 0.0
        %1595 = vmatpush1.msra.mxu0 0.0
        %1596 = vmatprep.subr.mxu0 0.0
        %1597 = vmatpush1.msra.mxu0 0.0
        %1598 = vmatprep.subr.mxu0 0.0
        %1599 = vmatpush1.msra.mxu0 0.0
        %1600 = vmatprep.subr.mxu0 0.0
        %1601 = vmatpush1.msra.mxu0 0.0
        %1602 = vmatprep.subr.mxu0 0.0
        %1603 = vmatpush1.msra.mxu0 0.0
        %1604 = vmatprep.subr.mxu0 0.0
        %1605 = vmatpush1.msra.mxu0 0.0
        %1606 = vmatprep.subr.mxu0 0.0
        %1607 = vmatpush1.msra.mxu0 0.0
        %1608 = vmatprep.subr.mxu0 0.0
        %1609 = vmatpush1.msra.mxu0 0.0
        %1610 = vmatprep.subr.mxu0 0.0
        %1611 = vmatpush1.msra.mxu0 0.0
        %1612 = vmatprep.subr.mxu0 0.0
        %1613 = vmatpush1.msra.mxu0 0.0
        %1614 = vmatprep.subr.mxu0 0.0
        %1615 = vmatpush1.msra.mxu0 0.0
        %1616 = vmatprep.subr.mxu0 0.0
        %1617 = vmatpush1.msra.mxu0 0.0
        %1618 = vmatprep.subr.mxu0 0.0
        %1619 = vmatpush1.msra.mxu0 0.0
        %1620 = vmatprep.subr.mxu0 0.0
        %1621 = vmatpush1.msra.mxu0 0.0
        %1622 = vmatprep.mubr.f32.mxu0 0.0
        %1623 = vmatmul.mubr.f32.gmra.mrb[0].mxu0 %v685
        %v1624 = vpop.f32.mrb[0].mxu0
        %v1625 = vadd.f32 %v1556, %v1624
        %v1626 = vpop.f32.mrb[0].mxu0
        %1627 = vdwg.mxu0
        %s1628 = scalar_lea.vmem [#allocation13], 64
        %v1629 = vld [vmem:[%s1628] sm:$0xff]
        %v1630 = vld [vmem:[%s1628 + $0x8] sm:$0xff]
        %v1631 = vld [vmem:[%s1628 + $0x10] sm:$0xff]
        %v1632 = vld [vmem:[%s1628 + $0x18] sm:$0xff]
        %s1633 = scalar_lea.vmem [#allocation14], 2
        %v1634 = vld [vmem:[%s1633] sm:$0x1]
        %v1636 = vlaneseq
        %v1637 = vshrl.u32 %v1636, 7
        %v1638 = vsub.s32 0, %v1637
        %v1639 = vrot.slane %v1634, %v1638
        %1641 = vmatprep.subr.mxu0 0.0
        %1642 = vmatpush1.msra.mxu0 %v1629
        %1643 = vmatprep.subr.mxu0 0.0
        %1644 = vmatpush1.msra.mxu0 %v1630
        %1645 = vmatprep.subr.mxu0 0.0
        %1646 = vmatpush1.msra.mxu0 %v1631
        %1647 = vmatprep.subr.mxu0 0.0
        %1648 = vmatpush1.msra.mxu0 %v1632
        %1649 = vmatprep.subr.mxu0 0.0
        %1650 = vmatpush1.msra.mxu0 0.0
        %1651 = vmatprep.subr.mxu0 0.0
        %1652 = vmatpush1.msra.mxu0 0.0
        %1653 = vmatprep.subr.mxu0 0.0
        %1654 = vmatpush1.msra.mxu0 0.0
        %1655 = vmatprep.subr.mxu0 0.0
        %1656 = vmatpush1.msra.mxu0 0.0
        %1657 = vmatprep.subr.mxu0 0.0
        %1658 = vmatpush1.msra.mxu0 0.0
        %1659 = vmatprep.subr.mxu0 0.0
        %1660 = vmatpush1.msra.mxu0 0.0
        %1661 = vmatprep.subr.mxu0 0.0
        %1662 = vmatpush1.msra.mxu0 0.0
        %1663 = vmatprep.subr.mxu0 0.0
        %1664 = vmatpush1.msra.mxu0 0.0
        %1665 = vmatprep.subr.mxu0 0.0
        %1666 = vmatpush1.msra.mxu0 0.0
        %1667 = vmatprep.subr.mxu0 0.0
        %1668 = vmatpush1.msra.mxu0 0.0
        %1669 = vmatprep.subr.mxu0 0.0
        %1670 = vmatpush1.msra.mxu0 0.0
        %1671 = vmatprep.subr.mxu0 0.0
        %1672 = vmatpush1.msra.mxu0 0.0
        %1673 = vmatprep.subr.mxu0 0.0
        %1674 = vmatpush1.msra.mxu0 0.0
        %1675 = vmatprep.subr.mxu0 0.0
        %1676 = vmatpush1.msra.mxu0 0.0
        %1677 = vmatprep.subr.mxu0 0.0
        %1678 = vmatpush1.msra.mxu0 0.0
        %1679 = vmatprep.subr.mxu0 0.0
        %1680 = vmatpush1.msra.mxu0 0.0
        %1681 = vmatprep.subr.mxu0 0.0
        %1682 = vmatpush1.msra.mxu0 0.0
        %1683 = vmatprep.subr.mxu0 0.0
        %1684 = vmatpush1.msra.mxu0 0.0
        %1685 = vmatprep.subr.mxu0 0.0
        %1686 = vmatpush1.msra.mxu0 0.0
        %1687 = vmatprep.subr.mxu0 0.0
        %1688 = vmatpush1.msra.mxu0 0.0
        %1689 = vmatprep.subr.mxu0 0.0
        %1690 = vmatpush1.msra.mxu0 0.0
        %1691 = vmatprep.subr.mxu0 0.0
        %1692 = vmatpush1.msra.mxu0 0.0
        %1693 = vmatprep.subr.mxu0 0.0
        %1694 = vmatpush1.msra.mxu0 0.0
        %1695 = vmatprep.subr.mxu0 0.0
        %1696 = vmatpush1.msra.mxu0 0.0
        %1697 = vmatprep.subr.mxu0 0.0
        %1698 = vmatpush1.msra.mxu0 0.0
        %1699 = vmatprep.subr.mxu0 0.0
        %1700 = vmatpush1.msra.mxu0 0.0
        %1701 = vmatprep.subr.mxu0 0.0
        %1702 = vmatpush1.msra.mxu0 0.0
        %1703 = vmatprep.subr.mxu0 0.0
        %1704 = vmatpush1.msra.mxu0 0.0
        %1705 = vmatprep.mubr.f32.mxu0 0.0
        %1706 = vmatmul.mubr.f32.gmra.mrb[0].mxu0 %v769
        %v1707 = vpop.f32.mrb[0].mxu0
        %v1708 = vadd.f32 %v1639, %v1707
        %v1709 = vpop.f32.mrb[0].mxu0
        %1710 = vdwg.mxu0
        %s1711 = scalar_lea.vmem [#allocation16], 64
        %v1712 = vld [vmem:[%s1711] sm:$0xff]
        %v1713 = vld [vmem:[%s1711 + $0x8] sm:$0xff]
        %v1714 = vld [vmem:[%s1711 + $0x10] sm:$0xff]
        %v1715 = vld [vmem:[%s1711 + $0x18] sm:$0xff]
        %s1716 = scalar_lea.vmem [#allocation17], 2
        %v1717 = vld [vmem:[%s1716] sm:$0x1]
        %v1719 = vlaneseq
        %v1720 = vshrl.u32 %v1719, 7
        %v1721 = vsub.s32 0, %v1720
        %v1722 = vrot.slane %v1717, %v1721
        %1724 = vmatprep.subr.mxu0 0.0
        %1725 = vmatpush1.msra.mxu0 %v1712
        %1726 = vmatprep.subr.mxu0 0.0
        %1727 = vmatpush1.msra.mxu0 %v1713
        %1728 = vmatprep.subr.mxu0 0.0
        %1729 = vmatpush1.msra.mxu0 %v1714
        %1730 = vmatprep.subr.mxu0 0.0
        %1731 = vmatpush1.msra.mxu0 %v1715
        %1732 = vmatprep.subr.mxu0 0.0
        %1733 = vmatpush1.msra.mxu0 0.0
        %1734 = vmatprep.subr.mxu0 0.0
        %1735 = vmatpush1.msra.mxu0 0.0
        %1736 = vmatprep.subr.mxu0 0.0
        %1737 = vmatpush1.msra.mxu0 0.0
        %1738 = vmatprep.subr.mxu0 0.0
        %1739 = vmatpush1.msra.mxu0 0.0
        %1740 = vmatprep.subr.mxu0 0.0
        %1741 = vmatpush1.msra.mxu0 0.0
        %1742 = vmatprep.subr.mxu0 0.0
        %1743 = vmatpush1.msra.mxu0 0.0
        %1744 = vmatprep.subr.mxu0 0.0
        %1745 = vmatpush1.msra.mxu0 0.0
        %1746 = vmatprep.subr.mxu0 0.0
        %1747 = vmatpush1.msra.mxu0 0.0
        %1748 = vmatprep.subr.mxu0 0.0
        %1749 = vmatpush1.msra.mxu0 0.0
        %1750 = vmatprep.subr.mxu0 0.0
        %1751 = vmatpush1.msra.mxu0 0.0
        %1752 = vmatprep.subr.mxu0 0.0
        %1753 = vmatpush1.msra.mxu0 0.0
        %1754 = vmatprep.subr.mxu0 0.0
        %1755 = vmatpush1.msra.mxu0 0.0
        %1756 = vmatprep.subr.mxu0 0.0
        %1757 = vmatpush1.msra.mxu0 0.0
        %1758 = vmatprep.subr.mxu0 0.0
        %1759 = vmatpush1.msra.mxu0 0.0
        %1760 = vmatprep.subr.mxu0 0.0
        %1761 = vmatpush1.msra.mxu0 0.0
        %1762 = vmatprep.subr.mxu0 0.0
        %1763 = vmatpush1.msra.mxu0 0.0
        %1764 = vmatprep.subr.mxu0 0.0
        %1765 = vmatpush1.msra.mxu0 0.0
        %1766 = vmatprep.subr.mxu0 0.0
        %1767 = vmatpush1.msra.mxu0 0.0
        %1768 = vmatprep.subr.mxu0 0.0
        %1769 = vmatpush1.msra.mxu0 0.0
        %1770 = vmatprep.subr.mxu0 0.0
        %1771 = vmatpush1.msra.mxu0 0.0
        %1772 = vmatprep.subr.mxu0 0.0
        %1773 = vmatpush1.msra.mxu0 0.0
        %1774 = vmatprep.subr.mxu0 0.0
        %1775 = vmatpush1.msra.mxu0 0.0
        %1776 = vmatprep.subr.mxu0 0.0
        %1777 = vmatpush1.msra.mxu0 0.0
        %1778 = vmatprep.subr.mxu0 0.0
        %1779 = vmatpush1.msra.mxu0 0.0
        %1780 = vmatprep.subr.mxu0 0.0
        %1781 = vmatpush1.msra.mxu0 0.0
        %1782 = vmatprep.subr.mxu0 0.0
        %1783 = vmatpush1.msra.mxu0 0.0
        %1784 = vmatprep.subr.mxu0 0.0
        %1785 = vmatpush1.msra.mxu0 0.0
        %1786 = vmatprep.subr.mxu0 0.0
        %1787 = vmatpush1.msra.mxu0 0.0
        %1788 = vmatprep.mubr.f32.mxu0 0.0
        %1789 = vmatmul.mubr.f32.gmra.mrb[0].mxu0 %v853
        %v1790 = vpop.f32.mrb[0].mxu0
        %v1791 = vadd.f32 %v1722, %v1790
        %v1792 = vpop.f32.mrb[0].mxu0
        %1793 = vdwg.mxu0
        %v1794 = vpack.c.bf16 %v1625, %v1625
        %v1795 = vpack.c.bf16 %v1708, %v1708
        %v1797 = vsel %vm933, %v1794, 0
        %v1800 = vsel %vm933, %v1795, 0
        %1802 = vmatprep.subr.bf16.mxu0 0
        %1803 = vmatpush1.bf16.xpose.msra.mxu0 %v1800
        %1804 = vmatprep.subr.bf16.mxu0 0
        %1805 = vmatpush1.bf16.xpose.msra.mxu0 0
        %1806 = vmatprep.subr.bf16.mxu0 0
        %1807 = vmatpush1.bf16.xpose.msra.mxu0 0
        %1808 = vmatprep.subr.bf16.mxu0 0
        %1809 = vmatpush1.bf16.xpose.msra.mxu0 0
        %1810 = vmatprep.subr.bf16.mxu0 0
        %1811 = vmatpush1.bf16.xpose.msra.mxu0 0
        %1812 = vmatprep.subr.bf16.mxu0 0
        %1813 = vmatpush1.bf16.xpose.msra.mxu0 0
        %1814 = vmatprep.subr.bf16.mxu0 0
        %1815 = vmatpush1.bf16.xpose.msra.mxu0 0
        %1816 = vmatprep.subr.bf16.mxu0 0
        %1817 = vmatpush1.bf16.xpose.msra.mxu0 0
        %1818 = vmatprep.subr.bf16.mxu0 0
        %1819 = vmatpush1.bf16.xpose.msra.mxu0 0
        %1820 = vmatprep.subr.bf16.mxu0 0
        %1821 = vmatpush1.bf16.xpose.msra.mxu0 0
        %1822 = vmatprep.subr.bf16.mxu0 0
        %1823 = vmatpush1.bf16.xpose.msra.mxu0 0
        %1824 = vmatprep.subr.bf16.mxu0 0
        %1825 = vmatpush1.bf16.xpose.msra.mxu0 0
        %1826 = vmatprep.subr.bf16.mxu0 0
        %1827 = vmatpush1.bf16.xpose.msra.mxu0 0
        %1828 = vmatprep.subr.bf16.mxu0 0
        %1829 = vmatpush1.bf16.xpose.msra.mxu0 0
        %1830 = vmatprep.subr.bf16.mxu0 0
        %1831 = vmatpush1.bf16.xpose.msra.mxu0 0
        %1832 = vmatprep.subr.bf16.mxu0 0
        %1833 = vmatpush1.bf16.xpose.msra.mxu0 0
        %1834 = vmatprep.mubr.bf16.mxu0 0
        %1835 = vmatmul.mubr.bf16.gmra.mrb[0].mxu0 %v1797
        %v1836 = vpop.f32.mrb[0].mxu0
        %v1837 = vadd.f32 %v931, %v1836
        %v1838 = vpop.f32.mrb[0].mxu0
        %v1839 = vpop.f32.mrb[0].mxu0
        %v1840 = vpop.f32.mrb[0].mxu0
        %1841 = vdwg.mxu0
        %v1842 = vsel %vm933, %v1837, -inf
        %1843 = vmax.xlane.f32.xlu0 %v1842
        %v1844 = vpop.xlane.xlu0 %1843
        %v1845 = vsub.f32 %v1837, %v1844
        %v1846 = vmul.f32 %v1845, 1.442695
        %v1847 = vpow.pop %v1846
        %v1848 = vsel %vm933, %v1847, 0.0
        %1849 = vadd.xlane.f32.xlu0 %v1848
        %v1850 = vpop.xlane.xlu0 %1849
        %v1851 = vpack.c.bf16 %v1847, %v1847
        %v1852 = vpack.c.bf16 %v1791, %v1791
        %v1854 = vsel %vm933, %v1851, 0
        %v1857 = vsel %vm994, %v1852, 0
        %1859 = vmatprep.subr.bf16.mxu0 0
        %1860 = vmatpush1.bf16.msra.mxu0 %v1857
        %1861 = vmatprep.subr.bf16.mxu0 0
        %1862 = vmatpush1.bf16.msra.mxu0 0
        %1863 = vmatprep.subr.bf16.mxu0 0
        %1864 = vmatpush1.bf16.msra.mxu0 0
        %1865 = vmatprep.subr.bf16.mxu0 0
        %1866 = vmatpush1.bf16.msra.mxu0 0
        %1867 = vmatprep.subr.bf16.mxu0 0
        %1868 = vmatpush1.bf16.msra.mxu0 0
        %1869 = vmatprep.subr.bf16.mxu0 0
        %1870 = vmatpush1.bf16.msra.mxu0 0
        %1871 = vmatprep.subr.bf16.mxu0 0
        %1872 = vmatpush1.bf16.msra.mxu0 0
        %1873 = vmatprep.subr.bf16.mxu0 0
        %1874 = vmatpush1.bf16.msra.mxu0 0
        %1875 = vmatprep.subr.bf16.mxu0 0
        %1876 = vmatpush1.bf16.msra.mxu0 0
        %1877 = vmatprep.subr.bf16.mxu0 0
        %1878 = vmatpush1.bf16.msra.mxu0 0
        %1879 = vmatprep.subr.bf16.mxu0 0
        %1880 = vmatpush1.bf16.msra.mxu0 0
        %1881 = vmatprep.subr.bf16.mxu0 0
        %1882 = vmatpush1.bf16.msra.mxu0 0
        %1883 = vmatprep.subr.bf16.mxu0 0
        %1884 = vmatpush1.bf16.msra.mxu0 0
        %1885 = vmatprep.subr.bf16.mxu0 0
        %1886 = vmatpush1.bf16.msra.mxu0 0
        %1887 = vmatprep.subr.bf16.mxu0 0
        %1888 = vmatpush1.bf16.msra.mxu0 0
        %1889 = vmatprep.subr.bf16.mxu0 0
        %1890 = vmatpush1.bf16.msra.mxu0 0
        %1891 = vmatprep.mubr.bf16.mxu0 0
        %1892 = vmatmul.mubr.bf16.gmra.mrb[0].mxu0 %v1854
        %v1893 = vpop.f32.mrb[0].mxu0
        %v1894 = vadd.f32 0.0, %v1893
        %v1895 = vpop.f32.mrb[0].mxu0
        %v1896 = vpop.f32.mrb[0].mxu0
        %v1897 = vpop.f32.mrb[0].mxu0
        %1898 = vdwg.mxu0
        %v1899 = vrcp.pop %v1850
        %v1900 = vmul.f32 %v1894, %v1899
        %s1901 = scalar_lea.vmem [#allocation19], 16
        %v1902 = vld [vmem:[%s1901] sm:$0xff]
        %v1904 = vsel %vm933, %v1900, 0
        %1906 = vmatprep.subr.mxu0 0.0
        %1907 = vmatpush1.msra.mxu0 %v1902
        %1908 = vmatprep.subr.mxu0 0.0
        %1909 = vmatpush1.msra.mxu0 0.0
        %1910 = vmatprep.subr.mxu0 0.0
        %1911 = vmatpush1.msra.mxu0 0.0
        %1912 = vmatprep.subr.mxu0 0.0
        %1913 = vmatpush1.msra.mxu0 0.0
        %1914 = vmatprep.subr.mxu0 0.0
        %1915 = vmatpush1.msra.mxu0 0.0
        %1916 = vmatprep.subr.mxu0 0.0
        %1917 = vmatpush1.msra.mxu0 0.0
        %1918 = vmatprep.subr.mxu0 0.0
        %1919 = vmatpush1.msra.mxu0 0.0
        %1920 = vmatprep.subr.mxu0 0.0
        %1921 = vmatpush1.msra.mxu0 0.0
        %1922 = vmatprep.subr.mxu0 0.0
        %1923 = vmatpush1.msra.mxu0 0.0
        %1924 = vmatprep.subr.mxu0 0.0
        %1925 = vmatpush1.msra.mxu0 0.0
        %1926 = vmatprep.subr.mxu0 0.0
        %1927 = vmatpush1.msra.mxu0 0.0
        %1928 = vmatprep.subr.mxu0 0.0
        %1929 = vmatpush1.msra.mxu0 0.0
        %1930 = vmatprep.subr.mxu0 0.0
        %1931 = vmatpush1.msra.mxu0 0.0
        %1932 = vmatprep.subr.mxu0 0.0
        %1933 = vmatpush1.msra.mxu0 0.0
        %1934 = vmatprep.subr.mxu0 0.0
        %1935 = vmatpush1.msra.mxu0 0.0
        %1936 = vmatprep.subr.mxu0 0.0
        %1937 = vmatpush1.msra.mxu0 0.0
        %1938 = vmatprep.subr.mxu0 0.0
        %1939 = vmatpush1.msra.mxu0 0.0
        %1940 = vmatprep.subr.mxu0 0.0
        %1941 = vmatpush1.msra.mxu0 0.0
        %1942 = vmatprep.subr.mxu0 0.0
        %1943 = vmatpush1.msra.mxu0 0.0
        %1944 = vmatprep.subr.mxu0 0.0
        %1945 = vmatpush1.msra.mxu0 0.0
        %1946 = vmatprep.subr.mxu0 0.0
        %1947 = vmatpush1.msra.mxu0 0.0
        %1948 = vmatprep.subr.mxu0 0.0
        %1949 = vmatpush1.msra.mxu0 0.0
        %1950 = vmatprep.subr.mxu0 0.0
        %1951 = vmatpush1.msra.mxu0 0.0
        %1952 = vmatprep.subr.mxu0 0.0
        %1953 = vmatpush1.msra.mxu0 0.0
        %1954 = vmatprep.subr.mxu0 0.0
        %1955 = vmatpush1.msra.mxu0 0.0
        %1956 = vmatprep.subr.mxu0 0.0
        %1957 = vmatpush1.msra.mxu0 0.0
        %1958 = vmatprep.subr.mxu0 0.0
        %1959 = vmatpush1.msra.mxu0 0.0
        %1960 = vmatprep.subr.mxu0 0.0
        %1961 = vmatpush1.msra.mxu0 0.0
        %1962 = vmatprep.subr.mxu0 0.0
        %1963 = vmatpush1.msra.mxu0 0.0
        %1964 = vmatprep.subr.mxu0 0.0
        %1965 = vmatpush1.msra.mxu0 0.0
        %1966 = vmatprep.subr.mxu0 0.0
        %1967 = vmatpush1.msra.mxu0 0.0
        %1968 = vmatprep.subr.mxu0 0.0
        %1969 = vmatpush1.msra.mxu0 0.0
        %1970 = vmatprep.mubr.f32.mxu0 0.0
        %1971 = vmatmul.mubr.f32.gmra.mrb[0].mxu0 %v1904
        %v1972 = vpop.f32.mrb[0].mxu0
        %v1973 = vadd.f32 0.0, %v1972
        %v1974 = vpop.f32.mrb[0].mxu0
        %1975 = vdwg.mxu0
        %v1976 = vadd.f32 %v1542, %v1973
        %s1977 = scalar_lea.vmem [#allocation10], 96
        %v1978 = vld [vmem:[%s1977] sm:$0xff]
        %v1979 = vld [vmem:[%s1977 + $0x8] sm:$0xff]
        %v1980 = vld [vmem:[%s1977 + $0x10] sm:$0xff]
        %v1981 = vld [vmem:[%s1977 + $0x18] sm:$0xff]
        %s1982 = scalar_lea.vmem [#allocation11], 3
        %v1983 = vld [vmem:[%s1982] sm:$0x1]
        %v1985 = vlaneseq
        %v1986 = vshrl.u32 %v1985, 7
        %v1987 = vsub.s32 0, %v1986
        %v1988 = vrot.slane %v1983, %v1987
        %1990 = vmatprep.subr.mxu0 0.0
        %1991 = vmatpush1.msra.mxu0 %v1978
        %1992 = vmatprep.subr.mxu0 0.0
        %1993 = vmatpush1.msra.mxu0 %v1979
        %1994 = vmatprep.subr.mxu0 0.0
        %1995 = vmatpush1.msra.mxu0 %v1980
        %1996 = vmatprep.subr.mxu0 0.0
        %1997 = vmatpush1.msra.mxu0 %v1981
        %1998 = vmatprep.subr.mxu0 0.0
        %1999 = vmatpush1.msra.mxu0 0.0
        %2000 = vmatprep.subr.mxu0 0.0
        %2001 = vmatpush1.msra.mxu0 0.0
        %2002 = vmatprep.subr.mxu0 0.0
        %2003 = vmatpush1.msra.mxu0 0.0
        %2004 = vmatprep.subr.mxu0 0.0
        %2005 = vmatpush1.msra.mxu0 0.0
        %2006 = vmatprep.subr.mxu0 0.0
        %2007 = vmatpush1.msra.mxu0 0.0
        %2008 = vmatprep.subr.mxu0 0.0
        %2009 = vmatpush1.msra.mxu0 0.0
        %2010 = vmatprep.subr.mxu0 0.0
        %2011 = vmatpush1.msra.mxu0 0.0
        %2012 = vmatprep.subr.mxu0 0.0
        %2013 = vmatpush1.msra.mxu0 0.0
        %2014 = vmatprep.subr.mxu0 0.0
        %2015 = vmatpush1.msra.mxu0 0.0
        %2016 = vmatprep.subr.mxu0 0.0
        %2017 = vmatpush1.msra.mxu0 0.0
        %2018 = vmatprep.subr.mxu0 0.0
        %2019 = vmatpush1.msra.mxu0 0.0
        %2020 = vmatprep.subr.mxu0 0.0
        %2021 = vmatpush1.msra.mxu0 0.0
        %2022 = vmatprep.subr.mxu0 0.0
        %2023 = vmatpush1.msra.mxu0 0.0
        %2024 = vmatprep.subr.mxu0 0.0
        %2025 = vmatpush1.msra.mxu0 0.0
        %2026 = vmatprep.subr.mxu0 0.0
        %2027 = vmatpush1.msra.mxu0 0.0
        %2028 = vmatprep.subr.mxu0 0.0
        %2029 = vmatpush1.msra.mxu0 0.0
        %2030 = vmatprep.subr.mxu0 0.0
        %2031 = vmatpush1.msra.mxu0 0.0
        %2032 = vmatprep.subr.mxu0 0.0
        %2033 = vmatpush1.msra.mxu0 0.0
        %2034 = vmatprep.subr.mxu0 0.0
        %2035 = vmatpush1.msra.mxu0 0.0
        %2036 = vmatprep.subr.mxu0 0.0
        %2037 = vmatpush1.msra.mxu0 0.0
        %2038 = vmatprep.subr.mxu0 0.0
        %2039 = vmatpush1.msra.mxu0 0.0
        %2040 = vmatprep.subr.mxu0 0.0
        %2041 = vmatpush1.msra.mxu0 0.0
        %2042 = vmatprep.subr.mxu0 0.0
        %2043 = vmatpush1.msra.mxu0 0.0
        %2044 = vmatprep.subr.mxu0 0.0
        %2045 = vmatpush1.msra.mxu0 0.0
        %2046 = vmatprep.subr.mxu0 0.0
        %2047 = vmatpush1.msra.mxu0 0.0
        %2048 = vmatprep.subr.mxu0 0.0
        %2049 = vmatpush1.msra.mxu0 0.0
        %2050 = vmatprep.subr.mxu0 0.0
        %2051 = vmatpush1.msra.mxu0 0.0
        %2052 = vmatprep.subr.mxu0 0.0
        %2053 = vmatpush1.msra.mxu0 0.0
        %2054 = vmatprep.mubr.f32.mxu0 0.0
        %2055 = vmatmul.mubr.f32.gmra.mrb[0].mxu0 %v685
        %v2056 = vpop.f32.mrb[0].mxu0
        %v2057 = vadd.f32 %v1988, %v2056
        %v2058 = vpop.f32.mrb[0].mxu0
        %2059 = vdwg.mxu0
        %s2060 = scalar_lea.vmem [#allocation13], 96
        %v2061 = vld [vmem:[%s2060] sm:$0xff]
        %v2062 = vld [vmem:[%s2060 + $0x8] sm:$0xff]
        %v2063 = vld [vmem:[%s2060 + $0x10] sm:$0xff]
        %v2064 = vld [vmem:[%s2060 + $0x18] sm:$0xff]
        %s2065 = scalar_lea.vmem [#allocation14], 3
        %v2066 = vld [vmem:[%s2065] sm:$0x1]
        %v2068 = vlaneseq
        %v2069 = vshrl.u32 %v2068, 7
        %v2070 = vsub.s32 0, %v2069
        %v2071 = vrot.slane %v2066, %v2070
        %2073 = vmatprep.subr.mxu0 0.0
        %2074 = vmatpush1.msra.mxu0 %v2061
        %2075 = vmatprep.subr.mxu0 0.0
        %2076 = vmatpush1.msra.mxu0 %v2062
        %2077 = vmatprep.subr.mxu0 0.0
        %2078 = vmatpush1.msra.mxu0 %v2063
        %2079 = vmatprep.subr.mxu0 0.0
        %2080 = vmatpush1.msra.mxu0 %v2064
        %2081 = vmatprep.subr.mxu0 0.0
        %2082 = vmatpush1.msra.mxu0 0.0
        %2083 = vmatprep.subr.mxu0 0.0
        %2084 = vmatpush1.msra.mxu0 0.0
        %2085 = vmatprep.subr.mxu0 0.0
        %2086 = vmatpush1.msra.mxu0 0.0
        %2087 = vmatprep.subr.mxu0 0.0
        %2088 = vmatpush1.msra.mxu0 0.0
        %2089 = vmatprep.subr.mxu0 0.0
        %2090 = vmatpush1.msra.mxu0 0.0
        %2091 = vmatprep.subr.mxu0 0.0
        %2092 = vmatpush1.msra.mxu0 0.0
        %2093 = vmatprep.subr.mxu0 0.0
        %2094 = vmatpush1.msra.mxu0 0.0
        %2095 = vmatprep.subr.mxu0 0.0
        %2096 = vmatpush1.msra.mxu0 0.0
        %2097 = vmatprep.subr.mxu0 0.0
        %2098 = vmatpush1.msra.mxu0 0.0
        %2099 = vmatprep.subr.mxu0 0.0
        %2100 = vmatpush1.msra.mxu0 0.0
        %2101 = vmatprep.subr.mxu0 0.0
        %2102 = vmatpush1.msra.mxu0 0.0
        %2103 = vmatprep.subr.mxu0 0.0
        %2104 = vmatpush1.msra.mxu0 0.0
        %2105 = vmatprep.subr.mxu0 0.0
        %2106 = vmatpush1.msra.mxu0 0.0
        %2107 = vmatprep.subr.mxu0 0.0
        %2108 = vmatpush1.msra.mxu0 0.0
        %2109 = vmatprep.subr.mxu0 0.0
        %2110 = vmatpush1.msra.mxu0 0.0
        %2111 = vmatprep.subr.mxu0 0.0
        %2112 = vmatpush1.msra.mxu0 0.0
        %2113 = vmatprep.subr.mxu0 0.0
        %2114 = vmatpush1.msra.mxu0 0.0
        %2115 = vmatprep.subr.mxu0 0.0
        %2116 = vmatpush1.msra.mxu0 0.0
        %2117 = vmatprep.subr.mxu0 0.0
        %2118 = vmatpush1.msra.mxu0 0.0
        %2119 = vmatprep.subr.mxu0 0.0
        %2120 = vmatpush1.msra.mxu0 0.0
        %2121 = vmatprep.subr.mxu0 0.0
        %2122 = vmatpush1.msra.mxu0 0.0
        %2123 = vmatprep.subr.mxu0 0.0
        %2124 = vmatpush1.msra.mxu0 0.0
        %2125 = vmatprep.subr.mxu0 0.0
        %2126 = vmatpush1.msra.mxu0 0.0
        %2127 = vmatprep.subr.mxu0 0.0
        %2128 = vmatpush1.msra.mxu0 0.0
        %2129 = vmatprep.subr.mxu0 0.0
        %2130 = vmatpush1.msra.mxu0 0.0
        %2131 = vmatprep.subr.mxu0 0.0
        %2132 = vmatpush1.msra.mxu0 0.0
        %2133 = vmatprep.subr.mxu0 0.0
        %2134 = vmatpush1.msra.mxu0 0.0
        %2135 = vmatprep.subr.mxu0 0.0
        %2136 = vmatpush1.msra.mxu0 0.0
        %2137 = vmatprep.mubr.f32.mxu0 0.0
        %2138 = vmatmul.mubr.f32.gmra.mrb[0].mxu0 %v769
        %v2139 = vpop.f32.mrb[0].mxu0
        %v2140 = vadd.f32 %v2071, %v2139
        %v2141 = vpop.f32.mrb[0].mxu0
        %2142 = vdwg.mxu0
        %s2143 = scalar_lea.vmem [#allocation16], 96
        %v2144 = vld [vmem:[%s2143] sm:$0xff]
        %v2145 = vld [vmem:[%s2143 + $0x8] sm:$0xff]
        %v2146 = vld [vmem:[%s2143 + $0x10] sm:$0xff]
        %v2147 = vld [vmem:[%s2143 + $0x18] sm:$0xff]
        %s2148 = scalar_lea.vmem [#allocation17], 3
        %v2149 = vld [vmem:[%s2148] sm:$0x1]
        %v2151 = vlaneseq
        %v2152 = vshrl.u32 %v2151, 7
        %v2153 = vsub.s32 0, %v2152
        %v2154 = vrot.slane %v2149, %v2153
        %2156 = vmatprep.subr.mxu0 0.0
        %2157 = vmatpush1.msra.mxu0 %v2144
        %2158 = vmatprep.subr.mxu0 0.0
        %2159 = vmatpush1.msra.mxu0 %v2145
        %2160 = vmatprep.subr.mxu0 0.0
        %2161 = vmatpush1.msra.mxu0 %v2146
        %2162 = vmatprep.subr.mxu0 0.0
        %2163 = vmatpush1.msra.mxu0 %v2147
        %2164 = vmatprep.subr.mxu0 0.0
        %2165 = vmatpush1.msra.mxu0 0.0
        %2166 = vmatprep.subr.mxu0 0.0
        %2167 = vmatpush1.msra.mxu0 0.0
        %2168 = vmatprep.subr.mxu0 0.0
        %2169 = vmatpush1.msra.mxu0 0.0
        %2170 = vmatprep.subr.mxu0 0.0
        %2171 = vmatpush1.msra.mxu0 0.0
        %2172 = vmatprep.subr.mxu0 0.0
        %2173 = vmatpush1.msra.mxu0 0.0
        %2174 = vmatprep.subr.mxu0 0.0
        %2175 = vmatpush1.msra.mxu0 0.0
        %2176 = vmatprep.subr.mxu0 0.0
        %2177 = vmatpush1.msra.mxu0 0.0
        %2178 = vmatprep.subr.mxu0 0.0
        %2179 = vmatpush1.msra.mxu0 0.0
        %2180 = vmatprep.subr.mxu0 0.0
        %2181 = vmatpush1.msra.mxu0 0.0
        %2182 = vmatprep.subr.mxu0 0.0
        %2183 = vmatpush1.msra.mxu0 0.0
        %2184 = vmatprep.subr.mxu0 0.0
        %2185 = vmatpush1.msra.mxu0 0.0
        %2186 = vmatprep.subr.mxu0 0.0
        %2187 = vmatpush1.msra.mxu0 0.0
        %2188 = vmatprep.subr.mxu0 0.0
        %2189 = vmatpush1.msra.mxu0 0.0
        %2190 = vmatprep.subr.mxu0 0.0
        %2191 = vmatpush1.msra.mxu0 0.0
        %2192 = vmatprep.subr.mxu0 0.0
        %2193 = vmatpush1.msra.mxu0 0.0
        %2194 = vmatprep.subr.mxu0 0.0
        %2195 = vmatpush1.msra.mxu0 0.0
        %2196 = vmatprep.subr.mxu0 0.0
        %2197 = vmatpush1.msra.mxu0 0.0
        %2198 = vmatprep.subr.mxu0 0.0
        %2199 = vmatpush1.msra.mxu0 0.0
        %2200 = vmatprep.subr.mxu0 0.0
        %2201 = vmatpush1.msra.mxu0 0.0
        %2202 = vmatprep.subr.mxu0 0.0
        %2203 = vmatpush1.msra.mxu0 0.0
        %2204 = vmatprep.subr.mxu0 0.0
        %2205 = vmatpush1.msra.mxu0 0.0
        %2206 = vmatprep.subr.mxu0 0.0
        %2207 = vmatpush1.msra.mxu0 0.0
        %2208 = vmatprep.subr.mxu0 0.0
        %2209 = vmatpush1.msra.mxu0 0.0
        %2210 = vmatprep.subr.mxu0 0.0
        %2211 = vmatpush1.msra.mxu0 0.0
        %2212 = vmatprep.subr.mxu0 0.0
        %2213 = vmatpush1.msra.mxu0 0.0
        %2214 = vmatprep.subr.mxu0 0.0
        %2215 = vmatpush1.msra.mxu0 0.0
        %2216 = vmatprep.subr.mxu0 0.0
        %2217 = vmatpush1.msra.mxu0 0.0
        %2218 = vmatprep.subr.mxu0 0.0
        %2219 = vmatpush1.msra.mxu0 0.0
        %2220 = vmatprep.mubr.f32.mxu0 0.0
        %2221 = vmatmul.mubr.f32.gmra.mrb[0].mxu0 %v853
        %v2222 = vpop.f32.mrb[0].mxu0
        %v2223 = vadd.f32 %v2154, %v2222
        %v2224 = vpop.f32.mrb[0].mxu0
        %2225 = vdwg.mxu0
        %v2226 = vpack.c.bf16 %v2057, %v2057
        %v2227 = vpack.c.bf16 %v2140, %v2140
        %v2229 = vsel %vm933, %v2226, 0
        %v2232 = vsel %vm933, %v2227, 0
        %2234 = vmatprep.subr.bf16.mxu0 0
        %2235 = vmatpush1.bf16.xpose.msra.mxu0 %v2232
        %2236 = vmatprep.subr.bf16.mxu0 0
        %2237 = vmatpush1.bf16.xpose.msra.mxu0 0
        %2238 = vmatprep.subr.bf16.mxu0 0
        %2239 = vmatpush1.bf16.xpose.msra.mxu0 0
        %2240 = vmatprep.subr.bf16.mxu0 0
        %2241 = vmatpush1.bf16.xpose.msra.mxu0 0
        %2242 = vmatprep.subr.bf16.mxu0 0
        %2243 = vmatpush1.bf16.xpose.msra.mxu0 0
        %2244 = vmatprep.subr.bf16.mxu0 0
        %2245 = vmatpush1.bf16.xpose.msra.mxu0 0
        %2246 = vmatprep.subr.bf16.mxu0 0
        %2247 = vmatpush1.bf16.xpose.msra.mxu0 0
        %2248 = vmatprep.subr.bf16.mxu0 0
        %2249 = vmatpush1.bf16.xpose.msra.mxu0 0
        %2250 = vmatprep.subr.bf16.mxu0 0
        %2251 = vmatpush1.bf16.xpose.msra.mxu0 0
        %2252 = vmatprep.subr.bf16.mxu0 0
        %2253 = vmatpush1.bf16.xpose.msra.mxu0 0
        %2254 = vmatprep.subr.bf16.mxu0 0
        %2255 = vmatpush1.bf16.xpose.msra.mxu0 0
        %2256 = vmatprep.subr.bf16.mxu0 0
        %2257 = vmatpush1.bf16.xpose.msra.mxu0 0
        %2258 = vmatprep.subr.bf16.mxu0 0
        %2259 = vmatpush1.bf16.xpose.msra.mxu0 0
        %2260 = vmatprep.subr.bf16.mxu0 0
        %2261 = vmatpush1.bf16.xpose.msra.mxu0 0
        %2262 = vmatprep.subr.bf16.mxu0 0
        %2263 = vmatpush1.bf16.xpose.msra.mxu0 0
        %2264 = vmatprep.subr.bf16.mxu0 0
        %2265 = vmatpush1.bf16.xpose.msra.mxu0 0
        %2266 = vmatprep.mubr.bf16.mxu0 0
        %2267 = vmatmul.mubr.bf16.gmra.mrb[0].mxu0 %v2229
        %v2268 = vpop.f32.mrb[0].mxu0
        %v2269 = vadd.f32 %v931, %v2268
        %v2270 = vpop.f32.mrb[0].mxu0
        %v2271 = vpop.f32.mrb[0].mxu0
        %v2272 = vpop.f32.mrb[0].mxu0
        %2273 = vdwg.mxu0
        %v2274 = vsel %vm933, %v2269, -inf
        %2275 = vmax.xlane.f32.xlu0 %v2274
        %v2276 = vpop.xlane.xlu0 %2275
        %v2277 = vsub.f32 %v2269, %v2276
        %v2278 = vmul.f32 %v2277, 1.442695
        %v2279 = vpow.pop %v2278
        %v2280 = vsel %vm933, %v2279, 0.0
        %2281 = vadd.xlane.f32.xlu0 %v2280
        %v2282 = vpop.xlane.xlu0 %2281
        %v2283 = vpack.c.bf16 %v2279, %v2279
        %v2284 = vpack.c.bf16 %v2223, %v2223
        %v2286 = vsel %vm933, %v2283, 0
        %v2289 = vsel %vm994, %v2284, 0
        %2291 = vmatprep.subr.bf16.mxu0 0
        %2292 = vmatpush1.bf16.msra.mxu0 %v2289
        %2293 = vmatprep.subr.bf16.mxu0 0
        %2294 = vmatpush1.bf16.msra.mxu0 0
        %2295 = vmatprep.subr.bf16.mxu0 0
        %2296 = vmatpush1.bf16.msra.mxu0 0
        %2297 = vmatprep.subr.bf16.mxu0 0
        %2298 = vmatpush1.bf16.msra.mxu0 0
        %2299 = vmatprep.subr.bf16.mxu0 0
        %2300 = vmatpush1.bf16.msra.mxu0 0
        %2301 = vmatprep.subr.bf16.mxu0 0
        %2302 = vmatpush1.bf16.msra.mxu0 0
        %2303 = vmatprep.subr.bf16.mxu0 0
        %2304 = vmatpush1.bf16.msra.mxu0 0
        %2305 = vmatprep.subr.bf16.mxu0 0
        %2306 = vmatpush1.bf16.msra.mxu0 0
        %2307 = vmatprep.subr.bf16.mxu0 0
        %2308 = vmatpush1.bf16.msra.mxu0 0
        %2309 = vmatprep.subr.bf16.mxu0 0
        %2310 = vmatpush1.bf16.msra.mxu0 0
        %2311 = vmatprep.subr.bf16.mxu0 0
        %2312 = vmatpush1.bf16.msra.mxu0 0
        %2313 = vmatprep.subr.bf16.mxu0 0
        %2314 = vmatpush1.bf16.msra.mxu0 0
        %2315 = vmatprep.subr.bf16.mxu0 0
        %2316 = vmatpush1.bf16.msra.mxu0 0
        %2317 = vmatprep.subr.bf16.mxu0 0
        %2318 = vmatpush1.bf16.msra.mxu0 0
        %2319 = vmatprep.subr.bf16.mxu0 0
        %2320 = vmatpush1.bf16.msra.mxu0 0
        %2321 = vmatprep.subr.bf16.mxu0 0
        %2322 = vmatpush1.bf16.msra.mxu0 0
        %2323 = vmatprep.mubr.bf16.mxu0 0
        %2324 = vmatmul.mubr.bf16.gmra.mrb[0].mxu0 %v2286
        %v2325 = vpop.f32.mrb[0].mxu0
        %v2326 = vadd.f32 0.0, %v2325
        %v2327 = vpop.f32.mrb[0].mxu0
        %v2328 = vpop.f32.mrb[0].mxu0
        %v2329 = vpop.f32.mrb[0].mxu0
        %2330 = vdwg.mxu0
        %v2331 = vrcp.pop %v2282
        %v2332 = vmul.f32 %v2326, %v2331
        %s2333 = scalar_lea.vmem [#allocation19], 24
        %v2334 = vld [vmem:[%s2333] sm:$0xff]
        %v2336 = vsel %vm933, %v2332, 0
        %2338 = vmatprep.subr.mxu0 0.0
        %2339 = vmatpush1.msra.mxu0 %v2334
        %2340 = vmatprep.subr.mxu0 0.0
        %2341 = vmatpush1.msra.mxu0 0.0
        %2342 = vmatprep.subr.mxu0 0.0
        %2343 = vmatpush1.msra.mxu0 0.0
        %2344 = vmatprep.subr.mxu0 0.0
        %2345 = vmatpush1.msra.mxu0 0.0
        %2346 = vmatprep.subr.mxu0 0.0
        %2347 = vmatpush1.msra.mxu0 0.0
        %2348 = vmatprep.subr.mxu0 0.0
        %2349 = vmatpush1.msra.mxu0 0.0
        %2350 = vmatprep.subr.mxu0 0.0
        %2351 = vmatpush1.msra.mxu0 0.0
        %2352 = vmatprep.subr.mxu0 0.0
        %2353 = vmatpush1.msra.mxu0 0.0
        %2354 = vmatprep.subr.mxu0 0.0
        %2355 = vmatpush1.msra.mxu0 0.0
        %2356 = vmatprep.subr.mxu0 0.0
        %2357 = vmatpush1.msra.mxu0 0.0
        %2358 = vmatprep.subr.mxu0 0.0
        %2359 = vmatpush1.msra.mxu0 0.0
        %2360 = vmatprep.subr.mxu0 0.0
        %2361 = vmatpush1.msra.mxu0 0.0
        %2362 = vmatprep.subr.mxu0 0.0
        %2363 = vmatpush1.msra.mxu0 0.0
        %2364 = vmatprep.subr.mxu0 0.0
        %2365 = vmatpush1.msra.mxu0 0.0
        %2366 = vmatprep.subr.mxu0 0.0
        %2367 = vmatpush1.msra.mxu0 0.0
        %2368 = vmatprep.subr.mxu0 0.0
        %2369 = vmatpush1.msra.mxu0 0.0
        %2370 = vmatprep.subr.mxu0 0.0
        %2371 = vmatpush1.msra.mxu0 0.0
        %2372 = vmatprep.subr.mxu0 0.0
        %2373 = vmatpush1.msra.mxu0 0.0
        %2374 = vmatprep.subr.mxu0 0.0
        %2375 = vmatpush1.msra.mxu0 0.0
        %2376 = vmatprep.subr.mxu0 0.0
        %2377 = vmatpush1.msra.mxu0 0.0
        %2378 = vmatprep.subr.mxu0 0.0
        %2379 = vmatpush1.msra.mxu0 0.0
        %2380 = vmatprep.subr.mxu0 0.0
        %2381 = vmatpush1.msra.mxu0 0.0
        %2382 = vmatprep.subr.mxu0 0.0
        %2383 = vmatpush1.msra.mxu0 0.0
        %2384 = vmatprep.subr.mxu0 0.0
        %2385 = vmatpush1.msra.mxu0 0.0
        %2386 = vmatprep.subr.mxu0 0.0
        %2387 = vmatpush1.msra.mxu0 0.0
        %2388 = vmatprep.subr.mxu0 0.0
        %2389 = vmatpush1.msra.mxu0 0.0
        %2390 = vmatprep.subr.mxu0 0.0
        %2391 = vmatpush1.msra.mxu0 0.0
        %2392 = vmatprep.subr.mxu0 0.0
        %2393 = vmatpush1.msra.mxu0 0.0
        %2394 = vmatprep.subr.mxu0 0.0
        %2395 = vmatpush1.msra.mxu0 0.0
        %2396 = vmatprep.subr.mxu0 0.0
        %2397 = vmatpush1.msra.mxu0 0.0
        %2398 = vmatprep.subr.mxu0 0.0
        %2399 = vmatpush1.msra.mxu0 0.0
        %2400 = vmatprep.subr.mxu0 0.0
        %2401 = vmatpush1.msra.mxu0 0.0
        %2402 = vmatprep.mubr.f32.mxu0 0.0
        %2403 = vmatmul.mubr.f32.gmra.mrb[0].mxu0 %v2336
        %v2404 = vpop.f32.mrb[0].mxu0
        %v2405 = vadd.f32 0.0, %v2404
        %v2406 = vpop.f32.mrb[0].mxu0
        %2407 = vdwg.mxu0
        %v2408 = vadd.f32 %v1976, %v2405
        %v2409 = vld [vmem:[#allocation20] sm:$0x1]
        %v2411 = vlaneseq
        %v2412 = vshrl.u32 %v2411, 7
        %v2413 = vsub.s32 0, %v2412
        %v2414 = vrot.slane %v2409, %v2413
        %v2416 = vadd.f32 %v2408, %v2414
        %2417 = vst.msk [vmem:[%s664] sm:$0xff] %vm683, %v2416
        %s2418 = sand.u32 %s335, 1
        %s2419 = scalar_lea.sflag [#allocation4], %s2418
        %s2420 = sand.u32 %s335, 1
        %s2421 = smul.addr %s2420, 8
        %s2422 = scalar_lea.vmem [#allocation22], %s2421
        // Predicated region
        $region117: #{tpu_custom_call.1} parent=67 // pred_check
          %p2423 = pneg %p345
        $region118: #{tpu_custom_call.1} parent=67 // pred_check_branch
          %2425 = sbr.rel (%p2423) target = $region120
        $region119: #{tpu_custom_call.1} parent=67 // pred_region
          %s2427 = ssub.s32 128, 128
          %2428 = vsyncadd %s2419, %s2427
          %s2429 = sadd.s32 %s44, %s43
          %s2430 = smul.addr %s2429, 128
          %s2431 = scalar_lea.hbm %s12, %s2430
          %s2433 = sshll.u32 %s2422, 4
          %s2434 = int_to_ptr.vmem [resolvable:$true] %s2433
          %2436 = dma.vmem_to_hbm [thread:$0]  %s2434, 128, %s2431, %s2419
        $region120: #{tpu_custom_call.1} parent=67 // pred_fallthru
          _
      $region68: #{tpu_custom_call.1} parent=5 // pred_fallthru
        _
      %p2437 = scmp.le.s32.totalorder 2, %s34
      // Predicated region
      $region121: #{tpu_custom_call.1} parent=5 // pred_check
        %p2438 = pneg %p2437
      $region122: #{tpu_custom_call.1} parent=5 // pred_check_branch
        %2440 = sbr.rel (%p2438) target = $region124
      $region123: #{tpu_custom_call.1} parent=5 // pred_region
        %s2441 = ssub.s32 %s34, 2
        // Predicated region
        $region125: #{tpu_custom_call.1} parent=123 // pred_check
          %p2442 = pneg %p351
        $region126: #{tpu_custom_call.1} parent=123 // pred_check_branch
          %2444 = sbr.rel (%p2442) target = $region128
        $region127: #{tpu_custom_call.1} parent=123 // pred_region
          %s2445 = sand.u32 %s336, 1
          %s2446 = scalar_lea.sflag [#allocation4], %s2445
          %s2447 = sand.u32 %s336, 1
          %s2448 = smul.addr %s2447, 8
          %s2449 = scalar_lea.vmem [#allocation22], %s2448
          %2450 = dma.done %s2446, 128
        $region128: #{tpu_custom_call.1} parent=123 // pred_fallthru
          _
      $region124: #{tpu_custom_call.1} parent=5 // pred_fallthru
        _
    $region6: #{tpu_custom_call.1} parent=1 // loop_footer
      %s38 = sadd.s32 1, %s34
    $region7: #{tpu_custom_call.1} parent=1 // loop_footer_branch
      %33 = sbr.rel target = $region3
    $region8: #{tpu_custom_call.1} parent=1 // loop_exit
      _
    %2451 = vsyncpa [#allocation3], 1
    %s2452 = scalar_lea.sflag [#allocation3], 1
    %2453 = vsyncpa %s2452, 1
    %2454 = vsyncpa [#allocation6], 1
    %s2455 = scalar_lea.sflag [#allocation6], 1
    %2456 = vsyncpa %s2455, 1
    %2457 = vsyncpa [#allocation9], 1
    %s2458 = scalar_lea.sflag [#allocation9], 1
    %2459 = vsyncpa %s2458, 1
    %2460 = vsyncpa [#allocation12], 1
    %2461 = vsyncpa [#allocation15], 1
    %2462 = vsyncpa [#allocation18], 1
    %2463 = vsyncpa [#allocation21], 1
    %2464 = vsyncpa [#allocation4], 1
    %s2465 = scalar_lea.sflag [#allocation4], 1
    %2466 = vsyncpa %s2465, 1

</llo_original>
